<compile_context>
chip_gen: v7x
topology: tpu7x:2x2x1
jax: 0.10.0
libtpu: 0.0.40
codegen_flags: <defaults>
</compile_context>

<pallas_src>
import jax
import jax.numpy as jnp
from jax.experimental import pallas as pl
from jax.experimental.pallas import tpu as pltpu


# ---------------------------------------------------------------------------
# Fused Pallas kernel (embedding -> LSTM stack -> attention -> fc_out)
# ---------------------------------------------------------------------------

def _make_decoder_kernel(n_layers, batch, emb_dim, hid_dim, src_len):
    H = hid_dim
    f32 = jnp.float32
    bf16 = jnp.bfloat16

    def kernel(*refs):
        # ref layout:
        #   0                    : ids_ref     SMEM [B] int32 (scalar prefetch)
        #   1 .. 4               : emb [O,E], h [L,B,H], c [L,B,H], ctx [S,B,H]
        #   5 .. 5+3L-1          : per layer (w_ih_t [E|H,4H], w_hh_t [H,4H], b [1,4H])
        #   next 5               : w_in [H,H], w_out_mix [H,H], w_out_q [H,H],
        #                          w_fc [H,O], b_fc [1,O]
        #   outputs              : pred [B,O], h_out [L,B,H], c_out [L,B,H]
        #   scratch              : x_scr VMEM [B,E] f32
        ids_ref = refs[0]
        emb_ref, h_ref, c_ref, ctx_ref = refs[1:5]
        pos = 5
        lstm_w = []
        for _ in range(n_layers):
            lstm_w.append(refs[pos:pos + 3])
            pos += 3
        w_in_ref, w_om_ref, w_oq_ref, w_fc_ref, b_fc_ref = refs[pos:pos + 5]
        pos += 5
        pred_ref, h_out_ref, c_out_ref = refs[pos:pos + 3]
        x_scr = refs[pos + 3]

        # ---- embedding row-gather (ids in SMEM); dropout == identity ----
        for b in range(batch):
            x_scr[pl.ds(b, 1), :] = emb_ref[pl.ds(ids_ref[b], 1), :]
        x = x_scr[...]                                        # [B, E] f32

        # ---- stacked LSTM cells, one decode step (state stays in vregs) ----
        for l in range(n_layers):
            wih_ref, whh_ref, bias_ref = lstm_w[l]
            h_prev = h_ref[l, :, :]                           # [B, H]
            c_prev = c_ref[l, :, :]                           # [B, H]
            gates = (
                jnp.dot(x.astype(bf16), wih_ref[...],
                        preferred_element_type=f32)
                + jnp.dot(h_prev.astype(bf16), whh_ref[...],
                          preferred_element_type=f32)
                + bias_ref[...]
            )                                                 # [B, 4H] f32
            # PyTorch gate order: input, forget, cell(g), output
            i_g = jax.nn.sigmoid(gates[:, 0:H])
            f_g = jax.nn.sigmoid(gates[:, H:2 * H])
            g_g = jnp.tanh(gates[:, 2 * H:3 * H])
            o_g = jax.nn.sigmoid(gates[:, 3 * H:4 * H])
            c_new = f_g * c_prev + i_g * g_g
            h_new = o_g * jnp.tanh(c_new)
            h_out_ref[l, :, :] = h_new
            c_out_ref[l, :, :] = c_new
            x = h_new                     # inter-layer dropout: identity (eval)

        # ---- general attention (output_len == 1) over encoder outputs ----
        q = jnp.dot(x.astype(bf16), w_in_ref[...],
                    preferred_element_type=f32)               # [B, H]

        # scores[b, s] = sum_h q[b, h] * ctx[s, b, h]  (ctx kept in [S,B,H])
        cols = []
        for s in range(src_len):
            cols.append(jnp.sum(q * ctx_ref[s, :, :], axis=-1, keepdims=True))
        scores = jnp.concatenate(cols, axis=-1)               # [B, S]

        # softmax over the source length S
        m = jnp.max(scores, axis=-1, keepdims=True)
        e = jnp.exp(scores - m)
        w = e * pl.reciprocal(jnp.sum(e, axis=-1, keepdims=True), approx=True)

        # mix[b, h] = sum_s w[b, s] * ctx[s, b, h]
        mix = jnp.zeros_like(q)
        for s in range(src_len):
            mix = mix + w[:, s:s + 1] * ctx_ref[s, :, :]      # [B, H]

        # linear_out([mix; q]) without the concat: two matmuls, summed
        attn = jnp.tanh(
            jnp.dot(mix.astype(bf16), w_om_ref[...], preferred_element_type=f32)
            + jnp.dot(q.astype(bf16), w_oq_ref[...], preferred_element_type=f32)
        )                                                     # [B, H]

        # prediction = fc_out(attn)
        pred_ref[...] = (
            jnp.dot(attn.astype(bf16), w_fc_ref[...], preferred_element_type=f32)
            + b_fc_ref[...])

    return kernel


def _full_block(shape):
    ndim = len(shape)
    # index_map receives (grid idx, scalar-prefetch ref); whole array = 1 block.
    return pl.BlockSpec(shape, lambda *_: (0,) * ndim)


# ---------------------------------------------------------------------------
# Parameter construction + full forward (glue)
# ---------------------------------------------------------------------------

def init_params(key, output_dim, emb_dim, hid_dim, n_layers):
    keys = jax.random.split(key, 6 + 4 * n_layers)
    k = iter(keys)
    bf16 = jnp.bfloat16
    params = {
        "embedding": 0.1 * jax.random.normal(next(k), (output_dim, emb_dim),
                                             jnp.float32),
        "lstm": [],
        # Attention / fc weights pre-transposed for row-major kernel matmuls,
        # stored bf16 (MXU operands).  For real PyTorch weights:
        #   w_in_t      = linear_in.weight.T
        #   w_out_mix_t = linear_out.weight.T[:H]   (rows multiplying `mix`)
        #   w_out_q_t   = linear_out.weight.T[H:]   (rows multiplying q)
        #   w_fc_t      = fc_out.weight.T, b_fc = fc_out.bias
        "w_in_t": (0.1 * jax.random.normal(next(k), (hid_dim, hid_dim),
                                           jnp.float32)).astype(bf16),
        "w_out_mix_t": (0.1 * jax.random.normal(next(k), (hid_dim, hid_dim),
                                                jnp.float32)).astype(bf16),
        "w_out_q_t": (0.1 * jax.random.normal(next(k), (hid_dim, hid_dim),
                                              jnp.float32)).astype(bf16),
        "w_fc_t": (0.1 * jax.random.normal(next(k), (hid_dim, output_dim),
                                           jnp.float32)).astype(bf16),
        "b_fc": 0.1 * jax.random.normal(next(k), (1, output_dim), jnp.float32),
    }
    for layer in range(n_layers):
        in_dim = emb_dim if layer == 0 else hid_dim
        w_ih_t = (0.1 * jax.random.normal(next(k), (in_dim, 4 * hid_dim),
                                          jnp.float32)).astype(bf16)
        w_hh_t = (0.1 * jax.random.normal(next(k), (hid_dim, 4 * hid_dim),
                                          jnp.float32)).astype(bf16)
        b_ih = 0.1 * jax.random.normal(next(k), (1, 4 * hid_dim), jnp.float32)
        b_hh = 0.1 * jax.random.normal(next(k), (1, 4 * hid_dim), jnp.float32)
        params["lstm"].append((w_ih_t, w_hh_t, b_ih + b_hh))
    return params


@jax.jit
def decoder_attention_forward(params, input_ids, encoder_output, hidden, cell):
    """Mirrors DecoderAttention.forward (eval mode: dropout == identity)."""
    n_layers, batch, hid_dim = hidden.shape
    src_len = encoder_output.shape[0]
    output_dim, emb_dim = params["embedding"].shape

    # ----- flatten inputs / specs (order must match kernel unpacking) -----
    inputs = [params["embedding"], hidden, cell, encoder_output]
    in_specs = [_full_block(params["embedding"].shape),
                _full_block(hidden.shape),
                _full_block(cell.shape),
                _full_block(encoder_output.shape)]
    for (w_ih_t, w_hh_t, b) in params["lstm"]:
        inputs += [w_ih_t, w_hh_t, b]
        in_specs += [_full_block(w_ih_t.shape), _full_block(w_hh_t.shape),
                     _full_block(b.shape)]
    tail = [params["w_in_t"], params["w_out_mix_t"], params["w_out_q_t"],
            params["w_fc_t"], params["b_fc"]]
    inputs += tail
    in_specs += [_full_block(t.shape) for t in tail]

    out_shape = (
        jax.ShapeDtypeStruct((batch, output_dim), jnp.float32),
        jax.ShapeDtypeStruct((n_layers, batch, hid_dim), jnp.float32),
        jax.ShapeDtypeStruct((n_layers, batch, hid_dim), jnp.float32),
    )
    out_specs = (
        _full_block((batch, output_dim)),
        _full_block((n_layers, batch, hid_dim)),
        _full_block((n_layers, batch, hid_dim)),
    )

    kernel = _make_decoder_kernel(n_layers, batch, emb_dim, hid_dim, src_len)

    grid_spec = pltpu.PrefetchScalarGridSpec(
        num_scalar_prefetch=1,          # input_ids -> SMEM, gathered in-kernel
        grid=(1,),
        in_specs=in_specs,
        out_specs=out_specs,
        scratch_shapes=[pltpu.VMEM((batch, emb_dim), jnp.float32)],
    )

    prediction, hidden_new, cell_new = pl.pallas_call(
        kernel,
        out_shape=out_shape,
        grid_spec=grid_spec,
        compiler_params=pltpu.CompilerParams(
            dimension_semantics=("arbitrary",)),
    )(input_ids, *inputs)

    # TODO(synk): input_output_aliases on hidden/cell (in-place state update)
    # skipped to keep buffer-donation semantics out of this single-step demo.
    return prediction, hidden_new, cell_new


# ---------------------------------------------------------------------------
# main
# ---------------------------------------------------------------------------

if __name__ == "__main__":
    OUTPUT_DIM = 16   # vocab size
    EMB_DIM = 32
    HID_DIM = 32
    N_LAYERS = 2
    BATCH = 4
    SRC_LEN = 8

    key = jax.random.PRNGKey(0)
    k_param, k_in, k_enc, k_h, k_c = jax.random.split(key, 5)

    params = init_params(k_param, OUTPUT_DIM, EMB_DIM, HID_DIM, N_LAYERS)

    input_ids = jax.random.randint(k_in, (BATCH,), 0, OUTPUT_DIM, jnp.int32)
    encoder_output = jax.random.normal(k_enc, (SRC_LEN, BATCH, HID_DIM),
                                       jnp.float32)
    hidden = jax.random.normal(k_h, (N_LAYERS, BATCH, HID_DIM), jnp.float32)
    cell = jax.random.normal(k_c, (N_LAYERS, BATCH, HID_DIM), jnp.float32)

    prediction, hidden_new, cell_new = decoder_attention_forward(
        params, input_ids, encoder_output, hidden, cell)
    jax.block_until_ready((prediction, hidden_new, cell_new))

    assert prediction.shape == (BATCH, OUTPUT_DIM)
    assert hidden_new.shape == (N_LAYERS, BATCH, HID_DIM)
    assert cell_new.shape == (N_LAYERS, BATCH, HID_DIM)
    assert prediction.dtype == jnp.float32

    print("KERNEL_OK")
</pallas_src>

<mosaic_0001>
module attributes {stable_mosaic.version = 11 : i64} {
  func.func @kernel(%arg0: i32, %arg1: memref<4xi32, #tpu.memory_space<smem>>, %arg2: memref<16x32xf32, #tpu.memory_space<vmem>>, %arg3: memref<2x4x32xf32, #tpu.memory_space<vmem>>, %arg4: memref<2x4x32xf32, #tpu.memory_space<vmem>>, %arg5: memref<8x4x32xf32, #tpu.memory_space<vmem>>, %arg6: memref<32x128xbf16, #tpu.memory_space<vmem>>, %arg7: memref<32x128xbf16, #tpu.memory_space<vmem>>, %arg8: memref<1x128xf32, #tpu.memory_space<vmem>>, %arg9: memref<32x128xbf16, #tpu.memory_space<vmem>>, %arg10: memref<32x128xbf16, #tpu.memory_space<vmem>>, %arg11: memref<1x128xf32, #tpu.memory_space<vmem>>, %arg12: memref<32x32xbf16, #tpu.memory_space<vmem>>, %arg13: memref<32x32xbf16, #tpu.memory_space<vmem>>, %arg14: memref<32x32xbf16, #tpu.memory_space<vmem>>, %arg15: memref<32x16xbf16, #tpu.memory_space<vmem>>, %arg16: memref<1x16xf32, #tpu.memory_space<vmem>>, %arg17: memref<4x16xf32, #tpu.memory_space<vmem>>, %arg18: memref<2x4x32xf32, #tpu.memory_space<vmem>>, %arg19: memref<2x4x32xf32, #tpu.memory_space<vmem>>, %arg20: memref<4x32xf32, #tpu.memory_space<vmem>>) attributes {dimension_semantics = [#tpu.dimension_semantics<arbitrary>], iteration_bounds = array<i64: 1>, scalar_prefetch = 1 : i64, scratch_operands = 1 : i64, tpu.core_type = #tpu.core_type<tc>, window_params = [{pipeline_mode = #tpu.pipeline_mode<synchronous>, transform_indices = @transform_0, window_bounds = array<i64: 16, 32>}, {pipeline_mode = #tpu.pipeline_mode<synchronous>, transform_indices = @transform_1, window_bounds = array<i64: 2, 4, 32>}, {pipeline_mode = #tpu.pipeline_mode<synchronous>, transform_indices = @transform_2, window_bounds = array<i64: 2, 4, 32>}, {pipeline_mode = #tpu.pipeline_mode<synchronous>, transform_indices = @transform_3, window_bounds = array<i64: 8, 4, 32>}, {pipeline_mode = #tpu.pipeline_mode<synchronous>, transform_indices = @transform_4, window_bounds = array<i64: 32, 128>}, {pipeline_mode = #tpu.pipeline_mode<synchronous>, transform_indices = @transform_5, window_bounds = array<i64: 32, 128>}, {pipeline_mode = #tpu.pipeline_mode<synchronous>, transform_indices = @transform_6, window_bounds = array<i64: 1, 128>}, {pipeline_mode = #tpu.pipeline_mode<synchronous>, transform_indices = @transform_7, window_bounds = array<i64: 32, 128>}, {pipeline_mode = #tpu.pipeline_mode<synchronous>, transform_indices = @transform_8, window_bounds = array<i64: 32, 128>}, {pipeline_mode = #tpu.pipeline_mode<synchronous>, transform_indices = @transform_9, window_bounds = array<i64: 1, 128>}, {pipeline_mode = #tpu.pipeline_mode<synchronous>, transform_indices = @transform_10, window_bounds = array<i64: 32, 32>}, {pipeline_mode = #tpu.pipeline_mode<synchronous>, transform_indices = @transform_11, window_bounds = array<i64: 32, 32>}, {pipeline_mode = #tpu.pipeline_mode<synchronous>, transform_indices = @transform_12, window_bounds = array<i64: 32, 32>}, {pipeline_mode = #tpu.pipeline_mode<synchronous>, transform_indices = @transform_13, window_bounds = array<i64: 32, 16>}, {pipeline_mode = #tpu.pipeline_mode<synchronous>, transform_indices = @transform_14, window_bounds = array<i64: 1, 16>}, {pipeline_mode = #tpu.pipeline_mode<synchronous>, transform_indices = @transform_15, window_bounds = array<i64: 4, 16>}, {pipeline_mode = #tpu.pipeline_mode<synchronous>, transform_indices = @transform_16, window_bounds = array<i64: 2, 4, 32>}, {pipeline_mode = #tpu.pipeline_mode<synchronous>, transform_indices = @transform_17, window_bounds = array<i64: 2, 4, 32>}]} {
    %c0 = arith.constant 0 : index
    %0 = memref.load %arg1[%c0] : memref<4xi32, #tpu.memory_space<smem>>
    %1 = arith.index_cast %0 : i32 to index
    %c0_0 = arith.constant 0 : index
    %2 = vector.load %arg2[%1, %c0_0] : memref<16x32xf32, #tpu.memory_space<vmem>>, vector<1x32xf32>
    %c0_1 = arith.constant 0 : index
    %c0_2 = arith.constant 0 : index
    %3 = vector.load %arg20[%c0_1, %c0_2] : memref<4x32xf32, #tpu.memory_space<vmem>>, vector<1x32xf32>
    tpu.vector_store %arg20[%c0_1, %c0_2], %2 {strides = array<i32>} : memref<4x32xf32, #tpu.memory_space<vmem>>, vector<1x32xf32>,
    %c1 = arith.constant 1 : index
    %4 = memref.load %arg1[%c1] : memref<4xi32, #tpu.memory_space<smem>>
    %5 = arith.index_cast %4 : i32 to index
    %c0_3 = arith.constant 0 : index
    %6 = vector.load %arg2[%5, %c0_3] : memref<16x32xf32, #tpu.memory_space<vmem>>, vector<1x32xf32>
    %c1_4 = arith.constant 1 : index
    %c0_5 = arith.constant 0 : index
    %7 = vector.load %arg20[%c1_4, %c0_5] : memref<4x32xf32, #tpu.memory_space<vmem>>, vector<1x32xf32>
    tpu.vector_store %arg20[%c1_4, %c0_5], %6 {strides = array<i32>} : memref<4x32xf32, #tpu.memory_space<vmem>>, vector<1x32xf32>,
    %c2 = arith.constant 2 : index
    %8 = memref.load %arg1[%c2] : memref<4xi32, #tpu.memory_space<smem>>
    %9 = arith.index_cast %8 : i32 to index
    %c0_6 = arith.constant 0 : index
    %10 = vector.load %arg2[%9, %c0_6] : memref<16x32xf32, #tpu.memory_space<vmem>>, vector<1x32xf32>
    %c2_7 = arith.constant 2 : index
    %c0_8 = arith.constant 0 : index
    %11 = vector.load %arg20[%c2_7, %c0_8] : memref<4x32xf32, #tpu.memory_space<vmem>>, vector<1x32xf32>
    tpu.vector_store %arg20[%c2_7, %c0_8], %10 {strides = array<i32>} : memref<4x32xf32, #tpu.memory_space<vmem>>, vector<1x32xf32>,
    %c3 = arith.constant 3 : index
    %12 = memref.load %arg1[%c3] : memref<4xi32, #tpu.memory_space<smem>>
    %13 = arith.index_cast %12 : i32 to index
    %c0_9 = arith.constant 0 : index
    %14 = vector.load %arg2[%13, %c0_9] : memref<16x32xf32, #tpu.memory_space<vmem>>, vector<1x32xf32>
    %c3_10 = arith.constant 3 : index
    %c0_11 = arith.constant 0 : index
    %15 = vector.load %arg20[%c3_10, %c0_11] : memref<4x32xf32, #tpu.memory_space<vmem>>, vector<1x32xf32>
    tpu.vector_store %arg20[%c3_10, %c0_11], %14 {strides = array<i32>} : memref<4x32xf32, #tpu.memory_space<vmem>>, vector<1x32xf32>,
    %c0_12 = arith.constant 0 : index
    %c0_13 = arith.constant 0 : index
    %16 = vector.load %arg20[%c0_12, %c0_13] : memref<4x32xf32, #tpu.memory_space<vmem>>, vector<4x32xf32>
    %c0_14 = arith.constant 0 : index
    %c0_15 = arith.constant 0 : index
    %c0_16 = arith.constant 0 : index
    %17 = vector.load %arg3[%c0_14, %c0_15, %c0_16] : memref<2x4x32xf32, #tpu.memory_space<vmem>>, vector<1x4x32xf32>
    %18 = vector.shape_cast %17 : vector<1x4x32xf32> to vector<4x32xf32>
    %c0_17 = arith.constant 0 : index
    %c0_18 = arith.constant 0 : index
    %c0_19 = arith.constant 0 : index
    %19 = vector.load %arg4[%c0_17, %c0_18, %c0_19] : memref<2x4x32xf32, #tpu.memory_space<vmem>>, vector<1x4x32xf32>
    %20 = vector.shape_cast %19 : vector<1x4x32xf32> to vector<4x32xf32>
    %21 = arith.truncf %16 : vector<4x32xf32> to vector<4x32xbf16>
    %c0_20 = arith.constant 0 : index
    %c0_21 = arith.constant 0 : index
    %22 = vector.load %arg6[%c0_20, %c0_21] : memref<32x128xbf16, #tpu.memory_space<vmem>>, vector<32x128xbf16>
    %cst = arith.constant dense<0.000000e+00> : vector<4x128xf32>
    %23 = tpu.matmul %21, %22, %cst {dimension_numbers = #tpu.dot_dimension_numbers<[1], [0], [0], [1], [0, 0, 1, 1], [], []>} : vector<4x32xbf16>, vector<32x128xbf16>, vector<4x128xf32> -> vector<4x128xf32>
    %24 = arith.truncf %18 : vector<4x32xf32> to vector<4x32xbf16>
    %c0_22 = arith.constant 0 : index
    %c0_23 = arith.constant 0 : index
    %25 = vector.load %arg7[%c0_22, %c0_23] : memref<32x128xbf16, #tpu.memory_space<vmem>>, vector<32x128xbf16>
    %cst_24 = arith.constant dense<0.000000e+00> : vector<4x128xf32>
    %26 = tpu.matmul %24, %25, %cst_24 {dimension_numbers = #tpu.dot_dimension_numbers<[1], [0], [0], [1], [0, 0, 1, 1], [], []>} : vector<4x32xbf16>, vector<32x128xbf16>, vector<4x128xf32> -> vector<4x128xf32>
    %27 = arith.addf %23, %26 : vector<4x128xf32>
    %c0_25 = arith.constant 0 : index
    %c0_26 = arith.constant 0 : index
    %28 = vector.load %arg8[%c0_25, %c0_26] : memref<1x128xf32, #tpu.memory_space<vmem>>, vector<1x128xf32>
    %29 = vector.broadcast %28 : vector<1x128xf32> to vector<4x128xf32>
    %30 = arith.addf %27, %29 : vector<4x128xf32>
    %31 = vector.extract_strided_slice %30 {offsets = [0, 0], sizes = [4, 32], strides = [1, 1]} : vector<4x128xf32> to vector<4x32xf32>
    %32 = arith.negf %31 : vector<4x32xf32>
    %33 = math.exp %32 : vector<4x32xf32>
    %cst_27 = arith.constant 1.000000e+00 : f32
    %34 = vector.broadcast %cst_27 : f32 to vector<4x32xf32>
    %35 = arith.addf %34, %33 : vector<4x32xf32>
    %36 = arith.divf %34, %35 : vector<4x32xf32>
    %37 = vector.extract_strided_slice %30 {offsets = [0, 32], sizes = [4, 32], strides = [1, 1]} : vector<4x128xf32> to vector<4x32xf32>
    %38 = arith.negf %37 : vector<4x32xf32>
    %39 = math.exp %38 : vector<4x32xf32>
    %cst_28 = arith.constant 1.000000e+00 : f32
    %40 = vector.broadcast %cst_28 : f32 to vector<4x32xf32>
    %41 = arith.addf %40, %39 : vector<4x32xf32>
    %42 = arith.divf %40, %41 : vector<4x32xf32>
    %43 = vector.extract_strided_slice %30 {offsets = [0, 64], sizes = [4, 32], strides = [1, 1]} : vector<4x128xf32> to vector<4x32xf32>
    %44 = math.tanh %43 : vector<4x32xf32>
    %45 = vector.extract_strided_slice %30 {offsets = [0, 96], sizes = [4, 32], strides = [1, 1]} : vector<4x128xf32> to vector<4x32xf32>
    %46 = arith.negf %45 : vector<4x32xf32>
    %47 = math.exp %46 : vector<4x32xf32>
    %cst_29 = arith.constant 1.000000e+00 : f32
    %48 = vector.broadcast %cst_29 : f32 to vector<4x32xf32>
    %49 = arith.addf %48, %47 : vector<4x32xf32>
    %50 = arith.divf %48, %49 : vector<4x32xf32>
    %51 = arith.mulf %42, %20 : vector<4x32xf32>
    %52 = arith.mulf %36, %44 : vector<4x32xf32>
    %53 = arith.addf %51, %52 : vector<4x32xf32>
    %54 = math.tanh %53 : vector<4x32xf32>
    %55 = arith.mulf %50, %54 : vector<4x32xf32>
    %c0_30 = arith.constant 0 : index
    %c0_31 = arith.constant 0 : index
    %c0_32 = arith.constant 0 : index
    %56 = vector.load %arg18[%c0_30, %c0_31, %c0_32] : memref<2x4x32xf32, #tpu.memory_space<vmem>>, vector<1x4x32xf32>
    %57 = vector.shape_cast %56 : vector<1x4x32xf32> to vector<4x32xf32>
    %58 = vector.shape_cast %55 : vector<4x32xf32> to vector<1x4x32xf32>
    tpu.vector_store %arg18[%c0_30, %c0_31, %c0_32], %58 {strides = array<i32>} : memref<2x4x32xf32, #tpu.memory_space<vmem>>, vector<1x4x32xf32>,
    %c0_33 = arith.constant 0 : index
    %c0_34 = arith.constant 0 : index
    %c0_35 = arith.constant 0 : index
    %59 = vector.load %arg19[%c0_33, %c0_34, %c0_35] : memref<2x4x32xf32, #tpu.memory_space<vmem>>, vector<1x4x32xf32>
    %60 = vector.shape_cast %59 : vector<1x4x32xf32> to vector<4x32xf32>
    %61 = vector.shape_cast %53 : vector<4x32xf32> to vector<1x4x32xf32>
    tpu.vector_store %arg19[%c0_33, %c0_34, %c0_35], %61 {strides = array<i32>} : memref<2x4x32xf32, #tpu.memory_space<vmem>>, vector<1x4x32xf32>,
    %c1_36 = arith.constant 1 : index
    %c0_37 = arith.constant 0 : index
    %c0_38 = arith.constant 0 : index
    %62 = vector.load %arg3[%c1_36, %c0_37, %c0_38] : memref<2x4x32xf32, #tpu.memory_space<vmem>>, vector<1x4x32xf32>
    %63 = vector.shape_cast %62 : vector<1x4x32xf32> to vector<4x32xf32>
    %c1_39 = arith.constant 1 : index
    %c0_40 = arith.constant 0 : index
    %c0_41 = arith.constant 0 : index
    %64 = vector.load %arg4[%c1_39, %c0_40, %c0_41] : memref<2x4x32xf32, #tpu.memory_space<vmem>>, vector<1x4x32xf32>
    %65 = vector.shape_cast %64 : vector<1x4x32xf32> to vector<4x32xf32>
    %66 = arith.truncf %55 : vector<4x32xf32> to vector<4x32xbf16>
    %c0_42 = arith.constant 0 : index
    %c0_43 = arith.constant 0 : index
    %67 = vector.load %arg9[%c0_42, %c0_43] : memref<32x128xbf16, #tpu.memory_space<vmem>>, vector<32x128xbf16>
    %cst_44 = arith.constant dense<0.000000e+00> : vector<4x128xf32>
    %68 = tpu.matmul %66, %67, %cst_44 {dimension_numbers = #tpu.dot_dimension_numbers<[1], [0], [0], [1], [0, 0, 1, 1], [], []>} : vector<4x32xbf16>, vector<32x128xbf16>, vector<4x128xf32> -> vector<4x128xf32>
    %69 = arith.truncf %63 : vector<4x32xf32> to vector<4x32xbf16>
    %c0_45 = arith.constant 0 : index
    %c0_46 = arith.constant 0 : index
    %70 = vector.load %arg10[%c0_45, %c0_46] : memref<32x128xbf16, #tpu.memory_space<vmem>>, vector<32x128xbf16>
    %cst_47 = arith.constant dense<0.000000e+00> : vector<4x128xf32>
    %71 = tpu.matmul %69, %70, %cst_47 {dimension_numbers = #tpu.dot_dimension_numbers<[1], [0], [0], [1], [0, 0, 1, 1], [], []>} : vector<4x32xbf16>, vector<32x128xbf16>, vector<4x128xf32> -> vector<4x128xf32>
    %72 = arith.addf %68, %71 : vector<4x128xf32>
    %c0_48 = arith.constant 0 : index
    %c0_49 = arith.constant 0 : index
    %73 = vector.load %arg11[%c0_48, %c0_49] : memref<1x128xf32, #tpu.memory_space<vmem>>, vector<1x128xf32>
    %74 = vector.broadcast %73 : vector<1x128xf32> to vector<4x128xf32>
    %75 = arith.addf %72, %74 : vector<4x128xf32>
    %76 = vector.extract_strided_slice %75 {offsets = [0, 0], sizes = [4, 32], strides = [1, 1]} : vector<4x128xf32> to vector<4x32xf32>
    %77 = arith.negf %76 : vector<4x32xf32>
    %78 = math.exp %77 : vector<4x32xf32>
    %cst_50 = arith.constant 1.000000e+00 : f32
    %79 = vector.broadcast %cst_50 : f32 to vector<4x32xf32>
    %80 = arith.addf %79, %78 : vector<4x32xf32>
    %81 = arith.divf %79, %80 : vector<4x32xf32>
    %82 = vector.extract_strided_slice %75 {offsets = [0, 32], sizes = [4, 32], strides = [1, 1]} : vector<4x128xf32> to vector<4x32xf32>
    %83 = arith.negf %82 : vector<4x32xf32>
    %84 = math.exp %83 : vector<4x32xf32>
    %cst_51 = arith.constant 1.000000e+00 : f32
    %85 = vector.broadcast %cst_51 : f32 to vector<4x32xf32>
    %86 = arith.addf %85, %84 : vector<4x32xf32>
    %87 = arith.divf %85, %86 : vector<4x32xf32>
    %88 = vector.extract_strided_slice %75 {offsets = [0, 64], sizes = [4, 32], strides = [1, 1]} : vector<4x128xf32> to vector<4x32xf32>
    %89 = math.tanh %88 : vector<4x32xf32>
    %90 = vector.extract_strided_slice %75 {offsets = [0, 96], sizes = [4, 32], strides = [1, 1]} : vector<4x128xf32> to vector<4x32xf32>
    %91 = arith.negf %90 : vector<4x32xf32>
    %92 = math.exp %91 : vector<4x32xf32>
    %cst_52 = arith.constant 1.000000e+00 : f32
    %93 = vector.broadcast %cst_52 : f32 to vector<4x32xf32>
    %94 = arith.addf %93, %92 : vector<4x32xf32>
    %95 = arith.divf %93, %94 : vector<4x32xf32>
    %96 = arith.mulf %87, %65 : vector<4x32xf32>
    %97 = arith.mulf %81, %89 : vector<4x32xf32>
    %98 = arith.addf %96, %97 : vector<4x32xf32>
    %99 = math.tanh %98 : vector<4x32xf32>
    %100 = arith.mulf %95, %99 : vector<4x32xf32>
    %c1_53 = arith.constant 1 : index
    %c0_54 = arith.constant 0 : index
    %c0_55 = arith.constant 0 : index
    %101 = vector.load %arg18[%c1_53, %c0_54, %c0_55] : memref<2x4x32xf32, #tpu.memory_space<vmem>>, vector<1x4x32xf32>
    %102 = vector.shape_cast %101 : vector<1x4x32xf32> to vector<4x32xf32>
    %103 = vector.shape_cast %100 : vector<4x32xf32> to vector<1x4x32xf32>
    tpu.vector_store %arg18[%c1_53, %c0_54, %c0_55], %103 {strides = array<i32>} : memref<2x4x32xf32, #tpu.memory_space<vmem>>, vector<1x4x32xf32>,
    %c1_56 = arith.constant 1 : index
    %c0_57 = arith.constant 0 : index
    %c0_58 = arith.constant 0 : index
    %104 = vector.load %arg19[%c1_56, %c0_57, %c0_58] : memref<2x4x32xf32, #tpu.memory_space<vmem>>, vector<1x4x32xf32>
    %105 = vector.shape_cast %104 : vector<1x4x32xf32> to vector<4x32xf32>
    %106 = vector.shape_cast %98 : vector<4x32xf32> to vector<1x4x32xf32>
    tpu.vector_store %arg19[%c1_56, %c0_57, %c0_58], %106 {strides = array<i32>} : memref<2x4x32xf32, #tpu.memory_space<vmem>>, vector<1x4x32xf32>,
    %107 = arith.truncf %100 : vector<4x32xf32> to vector<4x32xbf16>
    %c0_59 = arith.constant 0 : index
    %c0_60 = arith.constant 0 : index
    %108 = vector.load %arg12[%c0_59, %c0_60] : memref<32x32xbf16, #tpu.memory_space<vmem>>, vector<32x32xbf16>
    %cst_61 = arith.constant dense<0.000000e+00> : vector<4x32xf32>
    %109 = tpu.matmul %107, %108, %cst_61 {dimension_numbers = #tpu.dot_dimension_numbers<[1], [0], [0], [1], [0, 0, 1, 1], [], []>} : vector<4x32xbf16>, vector<32x32xbf16>, vector<4x32xf32> -> vector<4x32xf32>
    %c0_62 = arith.constant 0 : index
    %c0_63 = arith.constant 0 : index
    %c0_64 = arith.constant 0 : index
    %110 = vector.load %arg5[%c0_62, %c0_63, %c0_64] : memref<8x4x32xf32, #tpu.memory_space<vmem>>, vector<1x4x32xf32>
    %111 = vector.shape_cast %110 : vector<1x4x32xf32> to vector<4x32xf32>
    %112 = arith.mulf %109, %111 : vector<4x32xf32>
    %cst_65 = arith.constant dense<0.000000e+00> : vector<4xf32>
    %113 = vector.multi_reduction <add>, %112, %cst_65 [1] : vector<4x32xf32> to vector<4xf32>
    %114 = vector.shape_cast %113 : vector<4xf32> to vector<4x1xf32>
    %c1_66 = arith.constant 1 : index
    %c0_67 = arith.constant 0 : index
    %c0_68 = arith.constant 0 : index
    %115 = vector.load %arg5[%c1_66, %c0_67, %c0_68] : memref<8x4x32xf32, #tpu.memory_space<vmem>>, vector<1x4x32xf32>
    %116 = vector.shape_cast %115 : vector<1x4x32xf32> to vector<4x32xf32>
    %117 = arith.mulf %109, %116 : vector<4x32xf32>
    %cst_69 = arith.constant dense<0.000000e+00> : vector<4xf32>
    %118 = vector.multi_reduction <add>, %117, %cst_69 [1] : vector<4x32xf32> to vector<4xf32>
    %119 = vector.shape_cast %118 : vector<4xf32> to vector<4x1xf32>
    %c2_70 = arith.constant 2 : index
    %c0_71 = arith.constant 0 : index
    %c0_72 = arith.constant 0 : index
    %120 = vector.load %arg5[%c2_70, %c0_71, %c0_72] : memref<8x4x32xf32, #tpu.memory_space<vmem>>, vector<1x4x32xf32>
    %121 = vector.shape_cast %120 : vector<1x4x32xf32> to vector<4x32xf32>
    %122 = arith.mulf %109, %121 : vector<4x32xf32>
    %cst_73 = arith.constant dense<0.000000e+00> : vector<4xf32>
    %123 = vector.multi_reduction <add>, %122, %cst_73 [1] : vector<4x32xf32> to vector<4xf32>
    %124 = vector.shape_cast %123 : vector<4xf32> to vector<4x1xf32>
    %c3_74 = arith.constant 3 : index
    %c0_75 = arith.constant 0 : index
    %c0_76 = arith.constant 0 : index
    %125 = vector.load %arg5[%c3_74, %c0_75, %c0_76] : memref<8x4x32xf32, #tpu.memory_space<vmem>>, vector<1x4x32xf32>
    %126 = vector.shape_cast %125 : vector<1x4x32xf32> to vector<4x32xf32>
    %127 = arith.mulf %109, %126 : vector<4x32xf32>
    %cst_77 = arith.constant dense<0.000000e+00> : vector<4xf32>
    %128 = vector.multi_reduction <add>, %127, %cst_77 [1] : vector<4x32xf32> to vector<4xf32>
    %129 = vector.shape_cast %128 : vector<4xf32> to vector<4x1xf32>
    %c4 = arith.constant 4 : index
    %c0_78 = arith.constant 0 : index
    %c0_79 = arith.constant 0 : index
    %130 = vector.load %arg5[%c4, %c0_78, %c0_79] : memref<8x4x32xf32, #tpu.memory_space<vmem>>, vector<1x4x32xf32>
    %131 = vector.shape_cast %130 : vector<1x4x32xf32> to vector<4x32xf32>
    %132 = arith.mulf %109, %131 : vector<4x32xf32>
    %cst_80 = arith.constant dense<0.000000e+00> : vector<4xf32>
    %133 = vector.multi_reduction <add>, %132, %cst_80 [1] : vector<4x32xf32> to vector<4xf32>
    %134 = vector.shape_cast %133 : vector<4xf32> to vector<4x1xf32>
    %c5 = arith.constant 5 : index
    %c0_81 = arith.constant 0 : index
    %c0_82 = arith.constant 0 : index
    %135 = vector.load %arg5[%c5, %c0_81, %c0_82] : memref<8x4x32xf32, #tpu.memory_space<vmem>>, vector<1x4x32xf32>
    %136 = vector.shape_cast %135 : vector<1x4x32xf32> to vector<4x32xf32>
    %137 = arith.mulf %109, %136 : vector<4x32xf32>
    %cst_83 = arith.constant dense<0.000000e+00> : vector<4xf32>
    %138 = vector.multi_reduction <add>, %137, %cst_83 [1] : vector<4x32xf32> to vector<4xf32>
    %139 = vector.shape_cast %138 : vector<4xf32> to vector<4x1xf32>
    %c6 = arith.constant 6 : index
    %c0_84 = arith.constant 0 : index
    %c0_85 = arith.constant 0 : index
    %140 = vector.load %arg5[%c6, %c0_84, %c0_85] : memref<8x4x32xf32, #tpu.memory_space<vmem>>, vector<1x4x32xf32>
    %141 = vector.shape_cast %140 : vector<1x4x32xf32> to vector<4x32xf32>
    %142 = arith.mulf %109, %141 : vector<4x32xf32>
    %cst_86 = arith.constant dense<0.000000e+00> : vector<4xf32>
    %143 = vector.multi_reduction <add>, %142, %cst_86 [1] : vector<4x32xf32> to vector<4xf32>
    %144 = vector.shape_cast %143 : vector<4xf32> to vector<4x1xf32>
    %c7 = arith.constant 7 : index
    %c0_87 = arith.constant 0 : index
    %c0_88 = arith.constant 0 : index
    %145 = vector.load %arg5[%c7, %c0_87, %c0_88] : memref<8x4x32xf32, #tpu.memory_space<vmem>>, vector<1x4x32xf32>
    %146 = vector.shape_cast %145 : vector<1x4x32xf32> to vector<4x32xf32>
    %147 = arith.mulf %109, %146 : vector<4x32xf32>
    %cst_89 = arith.constant dense<0.000000e+00> : vector<4xf32>
    %148 = vector.multi_reduction <add>, %147, %cst_89 [1] : vector<4x32xf32> to vector<4xf32>
    %149 = vector.shape_cast %148 : vector<4xf32> to vector<4x1xf32>
    %150 = tpu.concatenate %114, %119, %124, %129, %134, %139, %144, %149 in 1 : vector<4x1xf32>, vector<4x1xf32>, vector<4x1xf32>, vector<4x1xf32>, vector<4x1xf32>, vector<4x1xf32>, vector<4x1xf32>, vector<4x1xf32> -> vector<4x8xf32>
    %cst_90 = arith.constant dense<0xFF800000> : vector<4xf32>
    %151 = vector.multi_reduction <maximumf>, %150, %cst_90 [1] : vector<4x8xf32> to vector<4xf32>
    %152 = vector.shape_cast %151 : vector<4xf32> to vector<4x1xf32>
    %153 = vector.broadcast %152 : vector<4x1xf32> to vector<4x8xf32>
    %154 = arith.subf %150, %153 : vector<4x8xf32>
    %155 = math.exp %154 : vector<4x8xf32>
    %cst_91 = arith.constant dense<0.000000e+00> : vector<4xf32>
    %156 = vector.multi_reduction <add>, %155, %cst_91 [1] : vector<4x8xf32> to vector<4xf32>
    %157 = vector.shape_cast %156 : vector<4xf32> to vector<4x1xf32>
    %158 = tpu.reciprocal %157 {approx = true} : vector<4x1xf32> -> vector<4x1xf32>
    %159 = vector.broadcast %158 : vector<4x1xf32> to vector<4x8xf32>
    %160 = arith.mulf %155, %159 : vector<4x8xf32>
    %cst_92 = arith.constant 0.000000e+00 : f32
    %161 = vector.broadcast %cst_92 : f32 to vector<4x32xf32>
    %162 = vector.extract_strided_slice %160 {offsets = [0, 0], sizes = [4, 1], strides = [1, 1]} : vector<4x8xf32> to vector<4x1xf32>
    %c0_93 = arith.constant 0 : index
    %c0_94 = arith.constant 0 : index
    %c0_95 = arith.constant 0 : index
    %163 = vector.load %arg5[%c0_93, %c0_94, %c0_95] : memref<8x4x32xf32, #tpu.memory_space<vmem>>, vector<1x4x32xf32>
    %164 = vector.shape_cast %163 : vector<1x4x32xf32> to vector<4x32xf32>
    %165 = vector.broadcast %162 : vector<4x1xf32> to vector<4x32xf32>
    %166 = arith.mulf %165, %164 : vector<4x32xf32>
    %167 = arith.addf %161, %166 : vector<4x32xf32>
    %168 = vector.extract_strided_slice %160 {offsets = [0, 1], sizes = [4, 1], strides = [1, 1]} : vector<4x8xf32> to vector<4x1xf32>
    %c1_96 = arith.constant 1 : index
    %c0_97 = arith.constant 0 : index
    %c0_98 = arith.constant 0 : index
    %169 = vector.load %arg5[%c1_96, %c0_97, %c0_98] : memref<8x4x32xf32, #tpu.memory_space<vmem>>, vector<1x4x32xf32>
    %170 = vector.shape_cast %169 : vector<1x4x32xf32> to vector<4x32xf32>
    %171 = vector.broadcast %168 : vector<4x1xf32> to vector<4x32xf32>
    %172 = arith.mulf %171, %170 : vector<4x32xf32>
    %173 = arith.addf %167, %172 : vector<4x32xf32>
    %174 = vector.extract_strided_slice %160 {offsets = [0, 2], sizes = [4, 1], strides = [1, 1]} : vector<4x8xf32> to vector<4x1xf32>
    %c2_99 = arith.constant 2 : index
    %c0_100 = arith.constant 0 : index
    %c0_101 = arith.constant 0 : index
    %175 = vector.load %arg5[%c2_99, %c0_100, %c0_101] : memref<8x4x32xf32, #tpu.memory_space<vmem>>, vector<1x4x32xf32>
    %176 = vector.shape_cast %175 : vector<1x4x32xf32> to vector<4x32xf32>
    %177 = vector.broadcast %174 : vector<4x1xf32> to vector<4x32xf32>
    %178 = arith.mulf %177, %176 : vector<4x32xf32>
    %179 = arith.addf %173, %178 : vector<4x32xf32>
    %180 = vector.extract_strided_slice %160 {offsets = [0, 3], sizes = [4, 1], strides = [1, 1]} : vector<4x8xf32> to vector<4x1xf32>
    %c3_102 = arith.constant 3 : index
    %c0_103 = arith.constant 0 : index
    %c0_104 = arith.constant 0 : index
    %181 = vector.load %arg5[%c3_102, %c0_103, %c0_104] : memref<8x4x32xf32, #tpu.memory_space<vmem>>, vector<1x4x32xf32>
    %182 = vector.shape_cast %181 : vector<1x4x32xf32> to vector<4x32xf32>
    %183 = vector.broadcast %180 : vector<4x1xf32> to vector<4x32xf32>
    %184 = arith.mulf %183, %182 : vector<4x32xf32>
    %185 = arith.addf %179, %184 : vector<4x32xf32>
    %186 = vector.extract_strided_slice %160 {offsets = [0, 4], sizes = [4, 1], strides = [1, 1]} : vector<4x8xf32> to vector<4x1xf32>
    %c4_105 = arith.constant 4 : index
    %c0_106 = arith.constant 0 : index
    %c0_107 = arith.constant 0 : index
    %187 = vector.load %arg5[%c4_105, %c0_106, %c0_107] : memref<8x4x32xf32, #tpu.memory_space<vmem>>, vector<1x4x32xf32>
    %188 = vector.shape_cast %187 : vector<1x4x32xf32> to vector<4x32xf32>
    %189 = vector.broadcast %186 : vector<4x1xf32> to vector<4x32xf32>
    %190 = arith.mulf %189, %188 : vector<4x32xf32>
    %191 = arith.addf %185, %190 : vector<4x32xf32>
    %192 = vector.extract_strided_slice %160 {offsets = [0, 5], sizes = [4, 1], strides = [1, 1]} : vector<4x8xf32> to vector<4x1xf32>
    %c5_108 = arith.constant 5 : index
    %c0_109 = arith.constant 0 : index
    %c0_110 = arith.constant 0 : index
    %193 = vector.load %arg5[%c5_108, %c0_109, %c0_110] : memref<8x4x32xf32, #tpu.memory_space<vmem>>, vector<1x4x32xf32>
    %194 = vector.shape_cast %193 : vector<1x4x32xf32> to vector<4x32xf32>
    %195 = vector.broadcast %192 : vector<4x1xf32> to vector<4x32xf32>
    %196 = arith.mulf %195, %194 : vector<4x32xf32>
    %197 = arith.addf %191, %196 : vector<4x32xf32>
    %198 = vector.extract_strided_slice %160 {offsets = [0, 6], sizes = [4, 1], strides = [1, 1]} : vector<4x8xf32> to vector<4x1xf32>
    %c6_111 = arith.constant 6 : index
    %c0_112 = arith.constant 0 : index
    %c0_113 = arith.constant 0 : index
    %199 = vector.load %arg5[%c6_111, %c0_112, %c0_113] : memref<8x4x32xf32, #tpu.memory_space<vmem>>, vector<1x4x32xf32>
    %200 = vector.shape_cast %199 : vector<1x4x32xf32> to vector<4x32xf32>
    %201 = vector.broadcast %198 : vector<4x1xf32> to vector<4x32xf32>
    %202 = arith.mulf %201, %200 : vector<4x32xf32>
    %203 = arith.addf %197, %202 : vector<4x32xf32>
    %204 = vector.extract_strided_slice %160 {offsets = [0, 7], sizes = [4, 1], strides = [1, 1]} : vector<4x8xf32> to vector<4x1xf32>
    %c7_114 = arith.constant 7 : index
    %c0_115 = arith.constant 0 : index
    %c0_116 = arith.constant 0 : index
    %205 = vector.load %arg5[%c7_114, %c0_115, %c0_116] : memref<8x4x32xf32, #tpu.memory_space<vmem>>, vector<1x4x32xf32>
    %206 = vector.shape_cast %205 : vector<1x4x32xf32> to vector<4x32xf32>
    %207 = vector.broadcast %204 : vector<4x1xf32> to vector<4x32xf32>
    %208 = arith.mulf %207, %206 : vector<4x32xf32>
    %209 = arith.addf %203, %208 : vector<4x32xf32>
    %210 = arith.truncf %209 : vector<4x32xf32> to vector<4x32xbf16>
    %c0_117 = arith.constant 0 : index
    %c0_118 = arith.constant 0 : index
    %211 = vector.load %arg13[%c0_117, %c0_118] : memref<32x32xbf16, #tpu.memory_space<vmem>>, vector<32x32xbf16>
    %cst_119 = arith.constant dense<0.000000e+00> : vector<4x32xf32>
    %212 = tpu.matmul %210, %211, %cst_119 {dimension_numbers = #tpu.dot_dimension_numbers<[1], [0], [0], [1], [0, 0, 1, 1], [], []>} : vector<4x32xbf16>, vector<32x32xbf16>, vector<4x32xf32> -> vector<4x32xf32>
    %213 = arith.truncf %109 : vector<4x32xf32> to vector<4x32xbf16>
    %c0_120 = arith.constant 0 : index
    %c0_121 = arith.constant 0 : index
    %214 = vector.load %arg14[%c0_120, %c0_121] : memref<32x32xbf16, #tpu.memory_space<vmem>>, vector<32x32xbf16>
    %cst_122 = arith.constant dense<0.000000e+00> : vector<4x32xf32>
    %215 = tpu.matmul %213, %214, %cst_122 {dimension_numbers = #tpu.dot_dimension_numbers<[1], [0], [0], [1], [0, 0, 1, 1], [], []>} : vector<4x32xbf16>, vector<32x32xbf16>, vector<4x32xf32> -> vector<4x32xf32>
    %216 = arith.addf %212, %215 : vector<4x32xf32>
    %217 = math.tanh %216 : vector<4x32xf32>
    %218 = arith.truncf %217 : vector<4x32xf32> to vector<4x32xbf16>
    %c0_123 = arith.constant 0 : index
    %c0_124 = arith.constant 0 : index
    %219 = vector.load %arg15[%c0_123, %c0_124] : memref<32x16xbf16, #tpu.memory_space<vmem>>, vector<32x16xbf16>
    %cst_125 = arith.constant dense<0.000000e+00> : vector<4x16xf32>
    %220 = tpu.matmul %218, %219, %cst_125 {dimension_numbers = #tpu.dot_dimension_numbers<[1], [0], [0], [1], [0, 0, 1, 1], [], []>} : vector<4x32xbf16>, vector<32x16xbf16>, vector<4x16xf32> -> vector<4x16xf32>
    %c0_126 = arith.constant 0 : index
    %c0_127 = arith.constant 0 : index
    %221 = vector.load %arg16[%c0_126, %c0_127] : memref<1x16xf32, #tpu.memory_space<vmem>>, vector<1x16xf32>
    %222 = vector.broadcast %221 : vector<1x16xf32> to vector<4x16xf32>
    %223 = arith.addf %220, %222 : vector<4x16xf32>
    %c0_128 = arith.constant 0 : index
    %c0_129 = arith.constant 0 : index
    %224 = vector.load %arg17[%c0_128, %c0_129] : memref<4x16xf32, #tpu.memory_space<vmem>>, vector<4x16xf32>
    tpu.vector_store %arg17[%c0_128, %c0_129], %223 {strides = array<i32>} : memref<4x16xf32, #tpu.memory_space<vmem>>, vector<4x16xf32>,
    return
  }
  func.func @transform_0(%arg0: i32, %arg1: memref<4xi32, #tpu.memory_space<smem>>) -> (i32, i32) {
    %c0_i32 = arith.constant 0 : i32
    %c0_i32_0 = arith.constant 0 : i32
    %c0_i32_1 = arith.constant 0 : i32
    return %c0_i32, %c0_i32_0 : i32, i32
  }
  func.func @transform_1(%arg0: i32, %arg1: memref<4xi32, #tpu.memory_space<smem>>) -> (i32, i32, i32) {
    %c0_i32 = arith.constant 0 : i32
    %c0_i32_0 = arith.constant 0 : i32
    %c0_i32_1 = arith.constant 0 : i32
    %c0_i32_2 = arith.constant 0 : i32
    return %c0_i32, %c0_i32_0, %c0_i32_1 : i32, i32, i32
  }
  func.func @transform_2(%arg0: i32, %arg1: memref<4xi32, #tpu.memory_space<smem>>) -> (i32, i32, i32) {
    %c0_i32 = arith.constant 0 : i32
    %c0_i32_0 = arith.constant 0 : i32
    %c0_i32_1 = arith.constant 0 : i32
    %c0_i32_2 = arith.constant 0 : i32
    return %c0_i32, %c0_i32_0, %c0_i32_1 : i32, i32, i32
  }
  func.func @transform_3(%arg0: i32, %arg1: memref<4xi32, #tpu.memory_space<smem>>) -> (i32, i32, i32) {
    %c0_i32 = arith.constant 0 : i32
    %c0_i32_0 = arith.constant 0 : i32
    %c0_i32_1 = arith.constant 0 : i32
    %c0_i32_2 = arith.constant 0 : i32
    return %c0_i32, %c0_i32_0, %c0_i32_1 : i32, i32, i32
  }
  func.func @transform_4(%arg0: i32, %arg1: memref<4xi32, #tpu.memory_space<smem>>) -> (i32, i32) {
    %c0_i32 = arith.constant 0 : i32
    %c0_i32_0 = arith.constant 0 : i32
    %c0_i32_1 = arith.constant 0 : i32
    return %c0_i32, %c0_i32_0 : i32, i32
  }
  func.func @transform_5(%arg0: i32, %arg1: memref<4xi32, #tpu.memory_space<smem>>) -> (i32, i32) {
    %c0_i32 = arith.constant 0 : i32
    %c0_i32_0 = arith.constant 0 : i32
    %c0_i32_1 = arith.constant 0 : i32
    return %c0_i32, %c0_i32_0 : i32, i32
  }
  func.func @transform_6(%arg0: i32, %arg1: memref<4xi32, #tpu.memory_space<smem>>) -> (i32, i32) {
    %c0_i32 = arith.constant 0 : i32
    %c0_i32_0 = arith.constant 0 : i32
    %c0_i32_1 = arith.constant 0 : i32
    return %c0_i32, %c0_i32_0 : i32, i32
  }
  func.func @transform_7(%arg0: i32, %arg1: memref<4xi32, #tpu.memory_space<smem>>) -> (i32, i32) {
    %c0_i32 = arith.constant 0 : i32
    %c0_i32_0 = arith.constant 0 : i32
    %c0_i32_1 = arith.constant 0 : i32
    return %c0_i32, %c0_i32_0 : i32, i32
  }
  func.func @transform_8(%arg0: i32, %arg1: memref<4xi32, #tpu.memory_space<smem>>) -> (i32, i32) {
    %c0_i32 = arith.constant 0 : i32
    %c0_i32_0 = arith.constant 0 : i32
    %c0_i32_1 = arith.constant 0 : i32
    return %c0_i32, %c0_i32_0 : i32, i32
  }
  func.func @transform_9(%arg0: i32, %arg1: memref<4xi32, #tpu.memory_space<smem>>) -> (i32, i32) {
    %c0_i32 = arith.constant 0 : i32
    %c0_i32_0 = arith.constant 0 : i32
    %c0_i32_1 = arith.constant 0 : i32
    return %c0_i32, %c0_i32_0 : i32, i32
  }
  func.func @transform_10(%arg0: i32, %arg1: memref<4xi32, #tpu.memory_space<smem>>) -> (i32, i32) {
    %c0_i32 = arith.constant 0 : i32
    %c0_i32_0 = arith.constant 0 : i32
    %c0_i32_1 = arith.constant 0 : i32
    return %c0_i32, %c0_i32_0 : i32, i32
  }
  func.func @transform_11(%arg0: i32, %arg1: memref<4xi32, #tpu.memory_space<smem>>) -> (i32, i32) {
    %c0_i32 = arith.constant 0 : i32
    %c0_i32_0 = arith.constant 0 : i32
    %c0_i32_1 = arith.constant 0 : i32
    return %c0_i32, %c0_i32_0 : i32, i32
  }
  func.func @transform_12(%arg0: i32, %arg1: memref<4xi32, #tpu.memory_space<smem>>) -> (i32, i32) {
    %c0_i32 = arith.constant 0 : i32
    %c0_i32_0 = arith.constant 0 : i32
    %c0_i32_1 = arith.constant 0 : i32
    return %c0_i32, %c0_i32_0 : i32, i32
  }
  func.func @transform_13(%arg0: i32, %arg1: memref<4xi32, #tpu.memory_space<smem>>) -> (i32, i32) {
    %c0_i32 = arith.constant 0 : i32
    %c0_i32_0 = arith.constant 0 : i32
    %c0_i32_1 = arith.constant 0 : i32
    return %c0_i32, %c0_i32_0 : i32, i32
  }
  func.func @transform_14(%arg0: i32, %arg1: memref<4xi32, #tpu.memory_space<smem>>) -> (i32, i32) {
    %c0_i32 = arith.constant 0 : i32
    %c0_i32_0 = arith.constant 0 : i32
    %c0_i32_1 = arith.constant 0 : i32
    return %c0_i32, %c0_i32_0 : i32, i32
  }
  func.func @transform_15(%arg0: i32, %arg1: memref<4xi32, #tpu.memory_space<smem>>) -> (i32, i32) {
    %c0_i32 = arith.constant 0 : i32
    %c0_i32_0 = arith.constant 0 : i32
    %c0_i32_1 = arith.constant 0 : i32
    return %c0_i32, %c0_i32_0 : i32, i32
  }
  func.func @transform_16(%arg0: i32, %arg1: memref<4xi32, #tpu.memory_space<smem>>) -> (i32, i32, i32) {
    %c0_i32 = arith.constant 0 : i32
    %c0_i32_0 = arith.constant 0 : i32
    %c0_i32_1 = arith.constant 0 : i32
    %c0_i32_2 = arith.constant 0 : i32
    return %c0_i32, %c0_i32_0, %c0_i32_1 : i32, i32, i32
  }
  func.func @transform_17(%arg0: i32, %arg1: memref<4xi32, #tpu.memory_space<smem>>) -> (i32, i32, i32) {
    %c0_i32 = arith.constant 0 : i32
    %c0_i32_0 = arith.constant 0 : i32
    %c0_i32_1 = arith.constant 0 : i32
    %c0_i32_2 = arith.constant 0 : i32
    return %c0_i32, %c0_i32_0, %c0_i32_1 : i32, i32, i32
  }
}

</mosaic_0001>

<llo_original>
// kernel: decoder_attention_forward.1
$region0: #{decoder_attention_forward.1}
  #allocation0 [shape = 'u32[]', space=smem, size = 0x4, offset = 0x4, fixed_abs, tag = 'smem constant byte address 0x4 - core index']
  #allocation1 [shape = 'u32[144,128]{1,0:T(1,128)}', space=vmem, size = 0x12000, scoped, tag = 'internal scratch']
  #allocation2 [shape = 'f32[4,32]{1,0:T(4,128)}', space=vmem, size = 0x800, scoped, tag = 'scratch operand']
  #allocation3 [shape = 's32[1]{0}', space=sflag, size = 0x4, scoped, tag = 'scoped memory for decoder_attention_forward.1']
  #allocation4 [shape = 'u8[512]{0}', space=smem, size = 0x200, scoped, tag = 'prefetched SMEM operand 0']
  %s0 = inlined_call_operand.hbm [shape: s32[4], index: 0, kind: input, shape index: {}]
  %s1 = inlined_call_operand.vmem [shape: f32[16,32], index: 1, kind: input, shape index: {}]
  %s2 = inlined_call_operand.vmem [shape: f32[2,4,32], index: 2, kind: input, shape index: {}]
  %s3 = inlined_call_operand.vmem [shape: f32[2,4,32], index: 3, kind: input, shape index: {}]
  %s4 = inlined_call_operand.vmem [shape: f32[8,4,32], index: 4, kind: input, shape index: {}]
  %s5 = inlined_call_operand.hbm [shape: bf16[32,128], index: 5, kind: input, shape index: {}]
  %s6 = inlined_call_operand.vmem [shape: bf16[32,128], index: 6, kind: input, shape index: {}]
  %s7 = inlined_call_operand.hbm [shape: f32[1,128], index: 7, kind: input, shape index: {}]
  %s8 = inlined_call_operand.hbm [shape: bf16[32,128], index: 8, kind: input, shape index: {}]
  %s9 = inlined_call_operand.hbm [shape: bf16[32,128], index: 9, kind: input, shape index: {}]
  %s10 = inlined_call_operand.hbm [shape: f32[1,128], index: 10, kind: input, shape index: {}]
  %s11 = inlined_call_operand.hbm [shape: bf16[32,32], index: 11, kind: input, shape index: {}]
  %s12 = inlined_call_operand.hbm [shape: bf16[32,32], index: 12, kind: input, shape index: {}]
  %s13 = inlined_call_operand.hbm [shape: bf16[32,32], index: 13, kind: input, shape index: {}]
  %s14 = inlined_call_operand.vmem [shape: bf16[32,16], index: 14, kind: input, shape index: {}]
  %s15 = inlined_call_operand.hbm [shape: f32[1,16], index: 15, kind: input, shape index: {}]
  %s16 = inlined_call_operand.hbm [shape: f32[4,16], index: 16, kind: output, shape index: {0}]
  %s17 = inlined_call_operand.hbm [shape: f32[2,4,32], index: 17, kind: output, shape index: {1}]
  %s18 = inlined_call_operand.hbm [shape: f32[2,4,32], index: 18, kind: output, shape index: {2}]
  %19 = xla_tuple %s16, %s17, %s18
  %s20 = sld [smem:[#allocation0]]
  $region122: #{decoder_attention_forward.1} parent=0
    _
  %s22 = ssub.s32 1, %s20
  %s23 = scalar_select 0, %s22, %s20
  %25 = dma.hbm_to_smem %s0, 16, [#allocation4], [#allocation3]
  %26 = dma.done [#allocation3], 16
  %27 = sfence
  $region1: #{decoder_attention_forward.1} parent=0
    #allocation5 [shape = 'u8[8192]{0}', space=vmem, size = 0x2000, scoped, tag = 'input window, operand 5, single buffered']
    #allocation6 [shape = 's32[1]{0}', space=sflag, size = 0x4, scoped, tag = 'scoped memory for decoder_attention_forward.1']
    #allocation7 [shape = 's32[1]{0}', space=sflag, size = 0x4, scoped, tag = 'scoped memory for decoder_attention_forward.1']
    #allocation8 [shape = 'u8[512]{0}', space=vmem, size = 0x400, scoped, tag = 'input window, operand 7, single buffered']
    #allocation9 [shape = 's32[1]{0}', space=sflag, size = 0x4, scoped, tag = 'scoped memory for decoder_attention_forward.1']
    #allocation10 [shape = 'u8[8192]{0}', space=vmem, size = 0x2000, scoped, tag = 'input window, operand 8, single buffered']
    #allocation11 [shape = 'u8[8192]{0}', space=vmem, size = 0x2000, scoped, tag = 'input window, operand 9, single buffered']
    #allocation12 [shape = 's32[1]{0}', space=sflag, size = 0x4, scoped, tag = 'scoped memory for decoder_attention_forward.1']
    #allocation13 [shape = 'u8[512]{0}', space=vmem, size = 0x400, scoped, tag = 'input window, operand 10, single buffered']
    #allocation14 [shape = 'u8[8192]{0}', space=vmem, size = 0x2000, scoped, tag = 'input window, operand 11, single buffered']
    #allocation15 [shape = 's32[1]{0}', space=sflag, size = 0x4, scoped, tag = 'scoped memory for decoder_attention_forward.1']
    #allocation16 [shape = 'u8[8192]{0}', space=vmem, size = 0x2000, scoped, tag = 'input window, operand 12, single buffered']
    #allocation17 [shape = 'u8[8192]{0}', space=vmem, size = 0x2000, scoped, tag = 'input window, operand 13, single buffered']
    #allocation18 [shape = 's32[1]{0}', space=sflag, size = 0x4, scoped, tag = 'scoped memory for decoder_attention_forward.1']
    #allocation19 [shape = 'u8[512]{0}', space=vmem, size = 0x400, scoped, tag = 'input window, operand 15, single buffered']
    #allocation20 [shape = 'u8[2048]{0}', space=vmem, size = 0x800, scoped, tag = 'output window, operand 0, single buffered']
    #allocation21 [shape = 'u8[4096]{0}', space=vmem, size = 0x1000, scoped, tag = 'output window, operand 1, single buffered']
    #allocation22 [shape = 's32[1]{0}', space=sflag, size = 0x4, scoped, tag = 'scoped memory for decoder_attention_forward.1']
    #allocation23 [shape = 'u8[4096]{0}', space=vmem, size = 0x1000, scoped, tag = 'output window, operand 2, single buffered']
    %28 = vsyncpa [#allocation6], 0
    %29 = vsyncpa [#allocation9], 0
    %30 = vsyncpa [#allocation12], 0
    %31 = vsyncpa [#allocation15], 0
    %32 = vsyncpa [#allocation18], 0
    %33 = vsyncpa [#allocation7], 0
    %34 = vsyncpa [#allocation22], 0
    // Predicated region
    $region2: #{decoder_attention_forward.1} parent=1 // pred_check
      _
    $region3: #{decoder_attention_forward.1} parent=1 // pred_check_branch
      %36 = sbr.rel (0) target = $region5
    $region4: #{decoder_attention_forward.1} parent=1 // pred_region
      _
    $region5: #{decoder_attention_forward.1} parent=1 // pred_fallthru
      _
    // Predicated region
    $region6: #{decoder_attention_forward.1} parent=1 // pred_check
      _
    $region7: #{decoder_attention_forward.1} parent=1 // pred_check_branch
      %38 = sbr.rel (0) target = $region9
    $region8: #{decoder_attention_forward.1} parent=1 // pred_region
      _
    $region9: #{decoder_attention_forward.1} parent=1 // pred_fallthru
      _
    // Predicated region
    $region10: #{decoder_attention_forward.1} parent=1 // pred_check
      _
    $region11: #{decoder_attention_forward.1} parent=1 // pred_check_branch
      %40 = sbr.rel (0) target = $region13
    $region12: #{decoder_attention_forward.1} parent=1 // pred_region
      _
    $region13: #{decoder_attention_forward.1} parent=1 // pred_fallthru
      _
    // Predicated region
    $region14: #{decoder_attention_forward.1} parent=1 // pred_check
      _
    $region15: #{decoder_attention_forward.1} parent=1 // pred_check_branch
      %42 = sbr.rel (0) target = $region17
    $region16: #{decoder_attention_forward.1} parent=1 // pred_region
      _
    $region17: #{decoder_attention_forward.1} parent=1 // pred_fallthru
      _
    // Predicated region
    $region18: #{decoder_attention_forward.1} parent=1 // pred_check
      _
    $region19: #{decoder_attention_forward.1} parent=1 // pred_check_branch
      %44 = sbr.rel (0) target = $region21
    $region20: #{decoder_attention_forward.1} parent=1 // pred_region
      %s46 = ssub.s32 256, 256
      %47 = vsyncadd [#allocation6], %s46
      %s48 = sshll.u32 [#allocation5], 4
      %s49 = int_to_ptr.vmem [resolvable:$true] %s48
      %54 = dma.hbm_to_vmem [thread:$0]  %s5, 256, %s49, [#allocation6], 64, 64, 4
    $region21: #{decoder_attention_forward.1} parent=1 // pred_fallthru
      _
    // Predicated region
    $region22: #{decoder_attention_forward.1} parent=1 // pred_check
      _
    $region23: #{decoder_attention_forward.1} parent=1 // pred_check_branch
      %56 = sbr.rel (0) target = $region25
    $region24: #{decoder_attention_forward.1} parent=1 // pred_region
      _
    $region25: #{decoder_attention_forward.1} parent=1 // pred_fallthru
      _
    // Predicated region
    $region26: #{decoder_attention_forward.1} parent=1 // pred_check
      _
    $region27: #{decoder_attention_forward.1} parent=1 // pred_check_branch
      %58 = sbr.rel (0) target = $region29
    $region28: #{decoder_attention_forward.1} parent=1 // pred_region
      %s60 = ssub.s32 16, 16
      %61 = vsyncadd [#allocation9], %s60
      %s63 = sshll.u32 [#allocation8], 4
      %s64 = int_to_ptr.vmem [resolvable:$true] %s63
      %66 = dma.hbm_to_vmem [thread:$0]  %s7, 16, %s64, [#allocation9]
    $region29: #{decoder_attention_forward.1} parent=1 // pred_fallthru
      _
    // Predicated region
    $region30: #{decoder_attention_forward.1} parent=1 // pred_check
      _
    $region31: #{decoder_attention_forward.1} parent=1 // pred_check_branch
      %68 = sbr.rel (0) target = $region33
    $region32: #{decoder_attention_forward.1} parent=1 // pred_region
      %s70 = ssub.s32 256, 256
      %71 = vsyncadd [#allocation9], %s70
      %s72 = sshll.u32 [#allocation10], 4
      %s73 = int_to_ptr.vmem [resolvable:$true] %s72
      %78 = dma.hbm_to_vmem [thread:$0]  %s8, 256, %s73, [#allocation9], 64, 64, 4
    $region33: #{decoder_attention_forward.1} parent=1 // pred_fallthru
      _
    // Predicated region
    $region34: #{decoder_attention_forward.1} parent=1 // pred_check
      _
    $region35: #{decoder_attention_forward.1} parent=1 // pred_check_branch
      %80 = sbr.rel (0) target = $region37
    $region36: #{decoder_attention_forward.1} parent=1 // pred_region
      %s82 = ssub.s32 256, 256
      %83 = vsyncadd [#allocation12], %s82
      %s84 = sshll.u32 [#allocation11], 4
      %s85 = int_to_ptr.vmem [resolvable:$true] %s84
      %90 = dma.hbm_to_vmem [thread:$0]  %s9, 256, %s85, [#allocation12], 64, 64, 4
    $region37: #{decoder_attention_forward.1} parent=1 // pred_fallthru
      _
    // Predicated region
    $region38: #{decoder_attention_forward.1} parent=1 // pred_check
      _
    $region39: #{decoder_attention_forward.1} parent=1 // pred_check_branch
      %92 = sbr.rel (0) target = $region41
    $region40: #{decoder_attention_forward.1} parent=1 // pred_region
      %s94 = ssub.s32 16, 16
      %95 = vsyncadd [#allocation12], %s94
      %s97 = sshll.u32 [#allocation13], 4
      %s98 = int_to_ptr.vmem [resolvable:$true] %s97
      %100 = dma.hbm_to_vmem [thread:$0]  %s10, 16, %s98, [#allocation12]
    $region41: #{decoder_attention_forward.1} parent=1 // pred_fallthru
      _
    // Predicated region
    $region42: #{decoder_attention_forward.1} parent=1 // pred_check
      _
    $region43: #{decoder_attention_forward.1} parent=1 // pred_check_branch
      %102 = sbr.rel (0) target = $region45
    $region44: #{decoder_attention_forward.1} parent=1 // pred_region
      %s104 = ssub.s32 256, 256
      %105 = vsyncadd [#allocation15], %s104
      %s106 = sshll.u32 [#allocation14], 4
      %s107 = int_to_ptr.vmem [resolvable:$true] %s106
      %112 = dma.hbm_to_vmem [thread:$0]  %s11, 256, %s107, [#allocation15], 64, 64, 4
    $region45: #{decoder_attention_forward.1} parent=1 // pred_fallthru
      _
    // Predicated region
    $region46: #{decoder_attention_forward.1} parent=1 // pred_check
      _
    $region47: #{decoder_attention_forward.1} parent=1 // pred_check_branch
      %114 = sbr.rel (0) target = $region49
    $region48: #{decoder_attention_forward.1} parent=1 // pred_region
      %s116 = ssub.s32 256, 256
      %117 = vsyncadd [#allocation15], %s116
      %s118 = sshll.u32 [#allocation16], 4
      %s119 = int_to_ptr.vmem [resolvable:$true] %s118
      %124 = dma.hbm_to_vmem [thread:$0]  %s12, 256, %s119, [#allocation15], 64, 64, 4
    $region49: #{decoder_attention_forward.1} parent=1 // pred_fallthru
      _
    // Predicated region
    $region50: #{decoder_attention_forward.1} parent=1 // pred_check
      _
    $region51: #{decoder_attention_forward.1} parent=1 // pred_check_branch
      %126 = sbr.rel (0) target = $region53
    $region52: #{decoder_attention_forward.1} parent=1 // pred_region
      %s128 = ssub.s32 256, 256
      %129 = vsyncadd [#allocation18], %s128
      %s130 = sshll.u32 [#allocation17], 4
      %s131 = int_to_ptr.vmem [resolvable:$true] %s130
      %136 = dma.hbm_to_vmem [thread:$0]  %s13, 256, %s131, [#allocation18], 64, 64, 4
    $region53: #{decoder_attention_forward.1} parent=1 // pred_fallthru
      _
    // Predicated region
    $region54: #{decoder_attention_forward.1} parent=1 // pred_check
      _
    $region55: #{decoder_attention_forward.1} parent=1 // pred_check_branch
      %138 = sbr.rel (0) target = $region57
    $region56: #{decoder_attention_forward.1} parent=1 // pred_region
      _
    $region57: #{decoder_attention_forward.1} parent=1 // pred_fallthru
      _
    // Predicated region
    $region58: #{decoder_attention_forward.1} parent=1 // pred_check
      _
    $region59: #{decoder_attention_forward.1} parent=1 // pred_check_branch
      %140 = sbr.rel (0) target = $region61
    $region60: #{decoder_attention_forward.1} parent=1 // pred_region
      %s142 = ssub.s32 16, 16
      %143 = vsyncadd [#allocation18], %s142
      %s145 = sshll.u32 [#allocation19], 4
      %s146 = int_to_ptr.vmem [resolvable:$true] %s145
      %148 = dma.hbm_to_vmem [thread:$0]  %s15, 16, %s146, [#allocation18]
    $region61: #{decoder_attention_forward.1} parent=1 // pred_fallthru
      _
    // Predicated region
    $region62: #{decoder_attention_forward.1} parent=1 // pred_check
      _
    $region63: #{decoder_attention_forward.1} parent=1 // pred_check_branch
      %150 = sbr.rel (0) target = $region65
    $region64: #{decoder_attention_forward.1} parent=1 // pred_region
      %151 = dma.done [#allocation6], 256
    $region65: #{decoder_attention_forward.1} parent=1 // pred_fallthru
      _
    // Predicated region
    $region66: #{decoder_attention_forward.1} parent=1 // pred_check
      _
    $region67: #{decoder_attention_forward.1} parent=1 // pred_check_branch
      %153 = sbr.rel (0) target = $region69
    $region68: #{decoder_attention_forward.1} parent=1 // pred_region
      %154 = dma.done [#allocation9], 16
    $region69: #{decoder_attention_forward.1} parent=1 // pred_fallthru
      _
    // Predicated region
    $region70: #{decoder_attention_forward.1} parent=1 // pred_check
      _
    $region71: #{decoder_attention_forward.1} parent=1 // pred_check_branch
      %156 = sbr.rel (0) target = $region73
    $region72: #{decoder_attention_forward.1} parent=1 // pred_region
      %157 = dma.done [#allocation9], 256
    $region73: #{decoder_attention_forward.1} parent=1 // pred_fallthru
      _
    // Predicated region
    $region74: #{decoder_attention_forward.1} parent=1 // pred_check
      _
    $region75: #{decoder_attention_forward.1} parent=1 // pred_check_branch
      %159 = sbr.rel (0) target = $region77
    $region76: #{decoder_attention_forward.1} parent=1 // pred_region
      %160 = dma.done [#allocation12], 256
    $region77: #{decoder_attention_forward.1} parent=1 // pred_fallthru
      _
    // Predicated region
    $region78: #{decoder_attention_forward.1} parent=1 // pred_check
      _
    $region79: #{decoder_attention_forward.1} parent=1 // pred_check_branch
      %162 = sbr.rel (0) target = $region81
    $region80: #{decoder_attention_forward.1} parent=1 // pred_region
      %163 = dma.done [#allocation12], 16
    $region81: #{decoder_attention_forward.1} parent=1 // pred_fallthru
      _
    // Predicated region
    $region82: #{decoder_attention_forward.1} parent=1 // pred_check
      _
    $region83: #{decoder_attention_forward.1} parent=1 // pred_check_branch
      %165 = sbr.rel (0) target = $region85
    $region84: #{decoder_attention_forward.1} parent=1 // pred_region
      %166 = dma.done [#allocation15], 256
    $region85: #{decoder_attention_forward.1} parent=1 // pred_fallthru
      _
    // Predicated region
    $region86: #{decoder_attention_forward.1} parent=1 // pred_check
      _
    $region87: #{decoder_attention_forward.1} parent=1 // pred_check_branch
      %168 = sbr.rel (0) target = $region89
    $region88: #{decoder_attention_forward.1} parent=1 // pred_region
      %169 = dma.done [#allocation15], 256
    $region89: #{decoder_attention_forward.1} parent=1 // pred_fallthru
      _
    // Predicated region
    $region90: #{decoder_attention_forward.1} parent=1 // pred_check
      _
    $region91: #{decoder_attention_forward.1} parent=1 // pred_check_branch
      %171 = sbr.rel (0) target = $region93
    $region92: #{decoder_attention_forward.1} parent=1 // pred_region
      %172 = dma.done [#allocation18], 256
    $region93: #{decoder_attention_forward.1} parent=1 // pred_fallthru
      _
    // Predicated region
    $region94: #{decoder_attention_forward.1} parent=1 // pred_check
      _
    $region95: #{decoder_attention_forward.1} parent=1 // pred_check_branch
      %174 = sbr.rel (0) target = $region97
    $region96: #{decoder_attention_forward.1} parent=1 // pred_region
      %175 = dma.done [#allocation18], 16
    $region97: #{decoder_attention_forward.1} parent=1 // pred_fallthru
      _
    %s177 = sld [smem:[#allocation4]]
    %s178 = scalar_lea.vmem %s1, %s177
    %v179 = vld [vmem:[%s178] sm:$0x1]
    %vm180 = vcmask 253952
    %181 = vst.msk [vmem:[#allocation2] sm:$0x1] %vm180, %v179
    %s182 = sld [smem:[#allocation4 + $0x1]]
    %s183 = scalar_lea.vmem %s1, %s182
    %v184 = vld [vmem:[%s183] sm:$0x1]
    %185 = vst.msk [vmem:[#allocation2 + $0x1] sm:$0x1] %vm180, %v184
    %s186 = sld [smem:[#allocation4 + $0x2]]
    %s187 = scalar_lea.vmem %s1, %s186
    %v188 = vld [vmem:[%s187] sm:$0x1]
    %189 = vst.msk [vmem:[#allocation2 + $0x2] sm:$0x1] %vm180, %v188
    %s190 = sld [smem:[#allocation4 + $0x3]]
    %s191 = scalar_lea.vmem %s1, %s190
    %v192 = vld [vmem:[%s191] sm:$0x1]
    %193 = vst.msk [vmem:[#allocation2 + $0x3] sm:$0x1] %vm180, %v192
    %v194 = vld [vmem:[#allocation2] sm:$0xf]
    %v195 = vld [vmem:[%s2] sm:$0xf]
    %v196 = vld [vmem:[%s3] sm:$0xf]
    %v197 = vpack.c.bf16 %v194, %v194
    %v198 = vld [vmem:[#allocation5] sm:$0xf]
    %v199 = vld [vmem:[#allocation5 + $0x4] sm:$0xf]
    %v200 = vld [vmem:[#allocation5 + $0x8] sm:$0xf]
    %v201 = vld [vmem:[#allocation5 + $0xc] sm:$0xf]
    %v202 = vpack.c.bf16 %v195, %v195
    %v203 = vld [vmem:[%s6] sm:$0xf]
    %v204 = vld [vmem:[%s6 + $0x4] sm:$0xf]
    %v205 = vld [vmem:[%s6 + $0x8] sm:$0xf]
    %v206 = vld [vmem:[%s6 + $0xc] sm:$0xf]
    %v211 = vunpack.c.l.b16 %v203
    %v212 = vunpack.c.l.b16 %v204
    %v213 = vunpack.c.l.b16 %v205
    %v214 = vunpack.c.l.b16 %v206
    %v215 = vpack.c.b16 %v212, %v211
    %v216 = vpack.c.b16 %v214, %v213
    %vm219 = vcmask 261120
    %v221 = vsel %vm219, %v202, 0
    %223 = vmatprep.subr.bf16.mxu0 0
    %224 = vmatpush1.bf16.msra.mxu0 %v215
    %225 = vmatprep.subr.bf16.mxu0 0
    %226 = vmatpush1.bf16.msra.mxu0 %v216
    %227 = vmatprep.subr.bf16.mxu0 0
    %228 = vmatpush1.bf16.msra.mxu0 0
    %229 = vmatprep.subr.bf16.mxu0 0
    %230 = vmatpush1.bf16.msra.mxu0 0
    %231 = vmatprep.subr.bf16.mxu0 0
    %232 = vmatpush1.bf16.msra.mxu0 0
    %233 = vmatprep.subr.bf16.mxu0 0
    %234 = vmatpush1.bf16.msra.mxu0 0
    %235 = vmatprep.subr.bf16.mxu0 0
    %236 = vmatpush1.bf16.msra.mxu0 0
    %237 = vmatprep.subr.bf16.mxu0 0
    %238 = vmatpush1.bf16.msra.mxu0 0
    %239 = vmatprep.subr.bf16.mxu0 0
    %240 = vmatpush1.bf16.msra.mxu0 0
    %241 = vmatprep.subr.bf16.mxu0 0
    %242 = vmatpush1.bf16.msra.mxu0 0
    %243 = vmatprep.subr.bf16.mxu0 0
    %244 = vmatpush1.bf16.msra.mxu0 0
    %245 = vmatprep.subr.bf16.mxu0 0
    %246 = vmatpush1.bf16.msra.mxu0 0
    %247 = vmatprep.subr.bf16.mxu0 0
    %248 = vmatpush1.bf16.msra.mxu0 0
    %249 = vmatprep.subr.bf16.mxu0 0
    %250 = vmatpush1.bf16.msra.mxu0 0
    %251 = vmatprep.subr.bf16.mxu0 0
    %252 = vmatpush1.bf16.msra.mxu0 0
    %253 = vmatprep.subr.bf16.mxu0 0
    %254 = vmatpush1.bf16.msra.mxu0 0
    %255 = vmatprep.mubr.bf16.mxu0 0
    %256 = vmatmul.mubr.bf16.gmra.mrb[0].mxu0 %v221
    %v257 = vpop.f32.mrb[0].mxu0
    %v258 = vadd.f32 0.0, %v257
    %v259 = vpop.f32.mrb[0].mxu0
    %v260 = vpop.f32.mrb[0].mxu0
    %v261 = vpop.f32.mrb[0].mxu0
    %262 = vdwg.mxu0
    %v267 = vunpack.c.l.b16 %v198
    %v268 = vunpack.c.l.b16 %v199
    %v269 = vunpack.c.l.b16 %v200
    %v270 = vunpack.c.l.b16 %v201
    %v271 = vpack.c.b16 %v268, %v267
    %v272 = vpack.c.b16 %v270, %v269
    %v276 = vsel %vm219, %v197, 0
    %278 = vmatprep.subr.bf16.mxu0 0
    %279 = vmatpush1.bf16.msra.mxu0 %v271
    %280 = vmatprep.subr.bf16.mxu0 0
    %281 = vmatpush1.bf16.msra.mxu0 %v272
    %282 = vmatprep.subr.bf16.mxu0 0
    %283 = vmatpush1.bf16.msra.mxu0 0
    %284 = vmatprep.subr.bf16.mxu0 0
    %285 = vmatpush1.bf16.msra.mxu0 0
    %286 = vmatprep.subr.bf16.mxu0 0
    %287 = vmatpush1.bf16.msra.mxu0 0
    %288 = vmatprep.subr.bf16.mxu0 0
    %289 = vmatpush1.bf16.msra.mxu0 0
    %290 = vmatprep.subr.bf16.mxu0 0
    %291 = vmatpush1.bf16.msra.mxu0 0
    %292 = vmatprep.subr.bf16.mxu0 0
    %293 = vmatpush1.bf16.msra.mxu0 0
    %294 = vmatprep.subr.bf16.mxu0 0
    %295 = vmatpush1.bf16.msra.mxu0 0
    %296 = vmatprep.subr.bf16.mxu0 0
    %297 = vmatpush1.bf16.msra.mxu0 0
    %298 = vmatprep.subr.bf16.mxu0 0
    %299 = vmatpush1.bf16.msra.mxu0 0
    %300 = vmatprep.subr.bf16.mxu0 0
    %301 = vmatpush1.bf16.msra.mxu0 0
    %302 = vmatprep.subr.bf16.mxu0 0
    %303 = vmatpush1.bf16.msra.mxu0 0
    %304 = vmatprep.subr.bf16.mxu0 0
    %305 = vmatpush1.bf16.msra.mxu0 0
    %306 = vmatprep.subr.bf16.mxu0 0
    %307 = vmatpush1.bf16.msra.mxu0 0
    %308 = vmatprep.subr.bf16.mxu0 0
    %309 = vmatpush1.bf16.msra.mxu0 0
    %310 = vmatprep.mubr.bf16.mxu0 0
    %311 = vmatmul.mubr.bf16.gmra.mrb[0].mxu0 %v276
    %v312 = vpop.f32.mrb[0].mxu0
    %v313 = vadd.f32 %v258, %v312
    %v314 = vpop.f32.mrb[0].mxu0
    %v315 = vpop.f32.mrb[0].mxu0
    %v316 = vpop.f32.mrb[0].mxu0
    %317 = vdwg.mxu0
    %v318 = vld [vmem:[#allocation8] sm:$0x1]
    %v320 = vlaneseq
    %v321 = vshrl.u32 %v320, 7
    %v322 = vsub.s32 0, %v321
    %v323 = vrot.slane %v318, %v322
    %v325 = vadd.f32 %v313, %v323
    %v326 = vxor.u32 %v325, 2147483648
    %v327 = vmul.f32 %v326, 1.442695
    %v328 = vpow.pop %v327
    %v329 = vadd.f32 %v328, 1.0
    %v330 = vrcp.pop %v329
    %v331 = vmul.f32 1.0, %v330
    %v332 = vtanh.pop %v325
    %334 = vrot.lane.b32.xlu0 %v196, 32
    %v335 = vpop.permute.xlu0 %334
    %v337 = vmul.f32 %v331, %v335
    %339 = vrot.lane.b32.xlu0 %v332, 64
    %v340 = vpop.permute.xlu0 %339
    %v342 = vmul.f32 %v331, %v340
    %344 = vrot.lane.b32.xlu0 %v342, 32
    %v345 = vpop.permute.xlu0 %344
    %v347 = vadd.f32 %v337, %v345
    %v348 = vtanh.pop %v347
    %350 = vrot.lane.b32.xlu0 %v348, 64
    %v351 = vpop.permute.xlu0 %350
    %v353 = vmul.f32 %v331, %v351
    %355 = vrot.lane.b32.xlu0 %v353, 32
    %v356 = vpop.permute.xlu0 %355
    %vm358 = vcmask 257024
    %359 = vst.msk [vmem:[#allocation21] sm:$0xf] %vm358, %v356
    %361 = vrot.lane.b32.xlu0 %v347, 96
    %v362 = vpop.permute.xlu0 %361
    %364 = vst.msk [vmem:[#allocation23] sm:$0xf] %vm358, %v362
    %s365 = scalar_lea.vmem %s2, 4
    %v366 = vld [vmem:[%s365] sm:$0xf]
    %s367 = scalar_lea.vmem %s3, 4
    %v368 = vld [vmem:[%s367] sm:$0xf]
    %v369 = vpack.c.bf16 %v353, %v353
    %v370 = vld [vmem:[#allocation10] sm:$0xf]
    %v371 = vld [vmem:[#allocation10 + $0x4] sm:$0xf]
    %v372 = vld [vmem:[#allocation10 + $0x8] sm:$0xf]
    %v373 = vld [vmem:[#allocation10 + $0xc] sm:$0xf]
    %v374 = vpack.c.bf16 %v366, %v366
    %v375 = vld [vmem:[#allocation11] sm:$0xf]
    %v376 = vld [vmem:[#allocation11 + $0x4] sm:$0xf]
    %v377 = vld [vmem:[#allocation11 + $0x8] sm:$0xf]
    %v378 = vld [vmem:[#allocation11 + $0xc] sm:$0xf]
    %v383 = vunpack.c.l.b16 %v375
    %v384 = vunpack.c.l.b16 %v376
    %v385 = vunpack.c.l.b16 %v377
    %v386 = vunpack.c.l.b16 %v378
    %v387 = vpack.c.b16 %v384, %v383
    %v388 = vpack.c.b16 %v386, %v385
    %v392 = vsel %vm219, %v374, 0
    %394 = vmatprep.subr.bf16.mxu0 0
    %395 = vmatpush1.bf16.msra.mxu0 %v387
    %396 = vmatprep.subr.bf16.mxu0 0
    %397 = vmatpush1.bf16.msra.mxu0 %v388
    %398 = vmatprep.subr.bf16.mxu0 0
    %399 = vmatpush1.bf16.msra.mxu0 0
    %400 = vmatprep.subr.bf16.mxu0 0
    %401 = vmatpush1.bf16.msra.mxu0 0
    %402 = vmatprep.subr.bf16.mxu0 0
    %403 = vmatpush1.bf16.msra.mxu0 0
    %404 = vmatprep.subr.bf16.mxu0 0
    %405 = vmatpush1.bf16.msra.mxu0 0
    %406 = vmatprep.subr.bf16.mxu0 0
    %407 = vmatpush1.bf16.msra.mxu0 0
    %408 = vmatprep.subr.bf16.mxu0 0
    %409 = vmatpush1.bf16.msra.mxu0 0
    %410 = vmatprep.subr.bf16.mxu0 0
    %411 = vmatpush1.bf16.msra.mxu0 0
    %412 = vmatprep.subr.bf16.mxu0 0
    %413 = vmatpush1.bf16.msra.mxu0 0
    %414 = vmatprep.subr.bf16.mxu0 0
    %415 = vmatpush1.bf16.msra.mxu0 0
    %416 = vmatprep.subr.bf16.mxu0 0
    %417 = vmatpush1.bf16.msra.mxu0 0
    %418 = vmatprep.subr.bf16.mxu0 0
    %419 = vmatpush1.bf16.msra.mxu0 0
    %420 = vmatprep.subr.bf16.mxu0 0
    %421 = vmatpush1.bf16.msra.mxu0 0
    %422 = vmatprep.subr.bf16.mxu0 0
    %423 = vmatpush1.bf16.msra.mxu0 0
    %424 = vmatprep.subr.bf16.mxu0 0
    %425 = vmatpush1.bf16.msra.mxu0 0
    %426 = vmatprep.mubr.bf16.mxu0 0
    %427 = vmatmul.mubr.bf16.gmra.mrb[0].mxu0 %v392
    %v428 = vpop.f32.mrb[0].mxu0
    %v429 = vadd.f32 0.0, %v428
    %v430 = vpop.f32.mrb[0].mxu0
    %v431 = vpop.f32.mrb[0].mxu0
    %v432 = vpop.f32.mrb[0].mxu0
    %433 = vdwg.mxu0
    %435 = vrot.lane.b32.xlu0 %v369, 32
    %v436 = vpop.permute.xlu0 %435
    %v441 = vunpack.c.l.b16 %v370
    %v442 = vunpack.c.l.b16 %v371
    %v443 = vunpack.c.l.b16 %v372
    %v444 = vunpack.c.l.b16 %v373
    %v445 = vpack.c.b16 %v442, %v441
    %v446 = vpack.c.b16 %v444, %v443
    %v450 = vsel %vm219, %v436, 0
    %452 = vmatprep.subr.bf16.mxu0 0
    %453 = vmatpush1.bf16.msra.mxu0 %v445
    %454 = vmatprep.subr.bf16.mxu0 0
    %455 = vmatpush1.bf16.msra.mxu0 %v446
    %456 = vmatprep.subr.bf16.mxu0 0
    %457 = vmatpush1.bf16.msra.mxu0 0
    %458 = vmatprep.subr.bf16.mxu0 0
    %459 = vmatpush1.bf16.msra.mxu0 0
    %460 = vmatprep.subr.bf16.mxu0 0
    %461 = vmatpush1.bf16.msra.mxu0 0
    %462 = vmatprep.subr.bf16.mxu0 0
    %463 = vmatpush1.bf16.msra.mxu0 0
    %464 = vmatprep.subr.bf16.mxu0 0
    %465 = vmatpush1.bf16.msra.mxu0 0
    %466 = vmatprep.subr.bf16.mxu0 0
    %467 = vmatpush1.bf16.msra.mxu0 0
    %468 = vmatprep.subr.bf16.mxu0 0
    %469 = vmatpush1.bf16.msra.mxu0 0
    %470 = vmatprep.subr.bf16.mxu0 0
    %471 = vmatpush1.bf16.msra.mxu0 0
    %472 = vmatprep.subr.bf16.mxu0 0
    %473 = vmatpush1.bf16.msra.mxu0 0
    %474 = vmatprep.subr.bf16.mxu0 0
    %475 = vmatpush1.bf16.msra.mxu0 0
    %476 = vmatprep.subr.bf16.mxu0 0
    %477 = vmatpush1.bf16.msra.mxu0 0
    %478 = vmatprep.subr.bf16.mxu0 0
    %479 = vmatpush1.bf16.msra.mxu0 0
    %480 = vmatprep.subr.bf16.mxu0 0
    %481 = vmatpush1.bf16.msra.mxu0 0
    %482 = vmatprep.subr.bf16.mxu0 0
    %483 = vmatpush1.bf16.msra.mxu0 0
    %484 = vmatprep.mubr.bf16.mxu0 0
    %485 = vmatmul.mubr.bf16.gmra.mrb[0].mxu0 %v450
    %v486 = vpop.f32.mrb[0].mxu0
    %v487 = vadd.f32 %v429, %v486
    %v488 = vpop.f32.mrb[0].mxu0
    %v489 = vpop.f32.mrb[0].mxu0
    %v490 = vpop.f32.mrb[0].mxu0
    %491 = vdwg.mxu0
    %v492 = vld [vmem:[#allocation13] sm:$0x1]
    %v494 = vlaneseq
    %v495 = vshrl.u32 %v494, 7
    %v496 = vsub.s32 0, %v495
    %v497 = vrot.slane %v492, %v496
    %v499 = vadd.f32 %v487, %v497
    %v500 = vxor.u32 %v499, 2147483648
    %v501 = vmul.f32 %v500, 1.442695
    %v502 = vpow.pop %v501
    %v503 = vadd.f32 %v502, 1.0
    %v504 = vrcp.pop %v503
    %v505 = vmul.f32 1.0, %v504
    %v506 = vtanh.pop %v499
    %508 = vrot.lane.b32.xlu0 %v368, 32
    %v509 = vpop.permute.xlu0 %508
    %v511 = vmul.f32 %v505, %v509
    %513 = vrot.lane.b32.xlu0 %v506, 64
    %v514 = vpop.permute.xlu0 %513
    %v516 = vmul.f32 %v505, %v514
    %518 = vrot.lane.b32.xlu0 %v516, 32
    %v519 = vpop.permute.xlu0 %518
    %v521 = vadd.f32 %v511, %v519
    %v522 = vtanh.pop %v521
    %524 = vrot.lane.b32.xlu0 %v522, 64
    %v525 = vpop.permute.xlu0 %524
    %v527 = vmul.f32 %v505, %v525
    %529 = vrot.lane.b32.xlu0 %v527, 32
    %v530 = vpop.permute.xlu0 %529
    %s532 = scalar_lea.vmem [#allocation21], 4
    %533 = vst.msk [vmem:[%s532] sm:$0xf] %vm358, %v530
    %535 = vrot.lane.b32.xlu0 %v521, 96
    %v536 = vpop.permute.xlu0 %535
    %s538 = scalar_lea.vmem [#allocation23], 4
    %539 = vst.msk [vmem:[%s538] sm:$0xf] %vm358, %v536
    %v540 = vpack.c.bf16 %v527, %v527
    %v541 = vld [vmem:[#allocation14] sm:$0xf]
    %v542 = vld [vmem:[#allocation14 + $0x4] sm:$0xf]
    %v543 = vld [vmem:[#allocation14 + $0x8] sm:$0xf]
    %v544 = vld [vmem:[#allocation14 + $0xc] sm:$0xf]
    %546 = vrot.lane.b32.xlu0 %v540, 32
    %v547 = vpop.permute.xlu0 %546
    %v552 = vunpack.c.l.b16 %v541
    %v553 = vunpack.c.l.b16 %v542
    %v554 = vunpack.c.l.b16 %v543
    %v555 = vunpack.c.l.b16 %v544
    %v556 = vpack.c.b16 %v553, %v552
    %v557 = vpack.c.b16 %v555, %v554
    %v561 = vsel %vm219, %v547, 0
    %563 = vmatprep.subr.bf16.mxu0 0
    %564 = vmatpush1.bf16.msra.mxu0 %v556
    %565 = vmatprep.subr.bf16.mxu0 0
    %566 = vmatpush1.bf16.msra.mxu0 %v557
    %567 = vmatprep.subr.bf16.mxu0 0
    %568 = vmatpush1.bf16.msra.mxu0 0
    %569 = vmatprep.subr.bf16.mxu0 0
    %570 = vmatpush1.bf16.msra.mxu0 0
    %571 = vmatprep.subr.bf16.mxu0 0
    %572 = vmatpush1.bf16.msra.mxu0 0
    %573 = vmatprep.subr.bf16.mxu0 0
    %574 = vmatpush1.bf16.msra.mxu0 0
    %575 = vmatprep.subr.bf16.mxu0 0
    %576 = vmatpush1.bf16.msra.mxu0 0
    %577 = vmatprep.subr.bf16.mxu0 0
    %578 = vmatpush1.bf16.msra.mxu0 0
    %579 = vmatprep.subr.bf16.mxu0 0
    %580 = vmatpush1.bf16.msra.mxu0 0
    %581 = vmatprep.subr.bf16.mxu0 0
    %582 = vmatpush1.bf16.msra.mxu0 0
    %583 = vmatprep.subr.bf16.mxu0 0
    %584 = vmatpush1.bf16.msra.mxu0 0
    %585 = vmatprep.subr.bf16.mxu0 0
    %586 = vmatpush1.bf16.msra.mxu0 0
    %587 = vmatprep.subr.bf16.mxu0 0
    %588 = vmatpush1.bf16.msra.mxu0 0
    %589 = vmatprep.subr.bf16.mxu0 0
    %590 = vmatpush1.bf16.msra.mxu0 0
    %591 = vmatprep.subr.bf16.mxu0 0
    %592 = vmatpush1.bf16.msra.mxu0 0
    %593 = vmatprep.subr.bf16.mxu0 0
    %594 = vmatpush1.bf16.msra.mxu0 0
    %595 = vmatprep.mubr.bf16.mxu0 0
    %596 = vmatmul.mubr.bf16.gmra.mrb[0].mxu0 %v561
    %v597 = vpop.f32.mrb[0].mxu0
    %v598 = vadd.f32 0.0, %v597
    %v599 = vpop.f32.mrb[0].mxu0
    %v600 = vpop.f32.mrb[0].mxu0
    %v601 = vpop.f32.mrb[0].mxu0
    %602 = vdwg.mxu0
    %v603 = vld [vmem:[%s4] sm:$0xf]
    %v604 = vmul.f32 %v598, %v603
    %v605 = vsel %vm358, %v604, 0.0
    %606 = vadd.xlane.f32.xlu0 %v605
    %v607 = vpop.xlane.xlu0 %606
    %s608 = scalar_lea.vmem %s4, 4
    %v609 = vld [vmem:[%s608] sm:$0xf]
    %v610 = vmul.f32 %v598, %v609
    %v611 = vsel %vm358, %v610, 0.0
    %612 = vadd.xlane.f32.xlu0 %v611
    %v613 = vpop.xlane.xlu0 %612
    %s614 = scalar_lea.vmem %s4, 8
    %v615 = vld [vmem:[%s614] sm:$0xf]
    %v616 = vmul.f32 %v598, %v615
    %v617 = vsel %vm358, %v616, 0.0
    %618 = vadd.xlane.f32.xlu0 %v617
    %v619 = vpop.xlane.xlu0 %618
    %s620 = scalar_lea.vmem %s4, 12
    %v621 = vld [vmem:[%s620] sm:$0xf]
    %v622 = vmul.f32 %v598, %v621
    %v623 = vsel %vm358, %v622, 0.0
    %624 = vadd.xlane.f32.xlu0 %v623
    %v625 = vpop.xlane.xlu0 %624
    %s626 = scalar_lea.vmem %s4, 16
    %v627 = vld [vmem:[%s626] sm:$0xf]
    %v628 = vmul.f32 %v598, %v627
    %v629 = vsel %vm358, %v628, 0.0
    %630 = vadd.xlane.f32.xlu0 %v629
    %v631 = vpop.xlane.xlu0 %630
    %s632 = scalar_lea.vmem %s4, 20
    %v633 = vld [vmem:[%s632] sm:$0xf]
    %v634 = vmul.f32 %v598, %v633
    %v635 = vsel %vm358, %v634, 0.0
    %636 = vadd.xlane.f32.xlu0 %v635
    %v637 = vpop.xlane.xlu0 %636
    %s638 = scalar_lea.vmem %s4, 24
    %v639 = vld [vmem:[%s638] sm:$0xf]
    %v640 = vmul.f32 %v598, %v639
    %v641 = vsel %vm358, %v640, 0.0
    %642 = vadd.xlane.f32.xlu0 %v641
    %v643 = vpop.xlane.xlu0 %642
    %s644 = scalar_lea.vmem %s4, 28
    %v645 = vld [vmem:[%s644] sm:$0xf]
    %v646 = vmul.f32 %v598, %v645
    %v647 = vsel %vm358, %v646, 0.0
    %648 = vadd.xlane.f32.xlu0 %v647
    %v649 = vpop.xlane.xlu0 %648
    %vm650 = vcmask 7168
    %v651 = vsel %vm650, %v607, %v613
    %vm652 = vcmask 15360
    %v653 = vsel %vm652, %v651, %v619
    %vm654 = vcmask 23552
    %v655 = vsel %vm654, %v653, %v625
    %vm656 = vcmask 31744
    %v657 = vsel %vm656, %v655, %v631
    %vm658 = vcmask 39936
    %v659 = vsel %vm658, %v657, %v637
    %vm660 = vcmask 48128
    %v661 = vsel %vm660, %v659, %v643
    %vm662 = vcmask 56320
    %v663 = vsel %vm662, %v661, %v649
    %vm664 = vcmask 60416
    %v665 = vsel %vm664, %v663, -inf
    %666 = vmax.xlane.f32.xlu0 %v665
    %v667 = vpop.xlane.xlu0 %666
    %v668 = vsub.f32 %v663, %v667
    %v669 = vmul.f32 %v668, 1.442695
    %v670 = vpow.pop %v669
    %v671 = vsel %vm664, %v670, 0.0
    %672 = vadd.xlane.f32.xlu0 %v671
    %v673 = vpop.xlane.xlu0 %672
    %v674 = vrcp.pop %v673
    %v675 = vmul.f32 %v670, %v674
    %677 = vset.pattern.permute.xlu0 0
    %678 = vperm.xlu0 %677, %v675
    %v679 = vpop.permute.xlu0 %678
    %v681 = vmul.f32 %v679, %v603
    %v682 = vadd.f32 %v681, 0.0
    %683 = vset.pattern.permute.xlu0 1
    %684 = vperm.xlu0 %683, %v675
    %v685 = vpop.permute.xlu0 %684
    %v687 = vmul.f32 %v685, %v609
    %v688 = vadd.f32 %v682, %v687
    %689 = vset.pattern.permute.xlu0 2
    %690 = vperm.xlu0 %689, %v675
    %v691 = vpop.permute.xlu0 %690
    %v693 = vmul.f32 %v691, %v615
    %v694 = vadd.f32 %v688, %v693
    %695 = vset.pattern.permute.xlu0 3
    %696 = vperm.xlu0 %695, %v675
    %v697 = vpop.permute.xlu0 %696
    %v699 = vmul.f32 %v697, %v621
    %v700 = vadd.f32 %v694, %v699
    %701 = vset.pattern.permute.xlu0 4
    %702 = vperm.xlu0 %701, %v675
    %v703 = vpop.permute.xlu0 %702
    %v705 = vmul.f32 %v703, %v627
    %v706 = vadd.f32 %v700, %v705
    %707 = vset.pattern.permute.xlu0 5
    %708 = vperm.xlu0 %707, %v675
    %v709 = vpop.permute.xlu0 %708
    %v711 = vmul.f32 %v709, %v633
    %v712 = vadd.f32 %v706, %v711
    %713 = vset.pattern.permute.xlu0 6
    %714 = vperm.xlu0 %713, %v675
    %v715 = vpop.permute.xlu0 %714
    %v717 = vmul.f32 %v715, %v639
    %v718 = vadd.f32 %v712, %v717
    %719 = vset.pattern.permute.xlu0 7
    %720 = vperm.xlu0 %719, %v675
    %v721 = vpop.permute.xlu0 %720
    %v723 = vmul.f32 %v721, %v645
    %v724 = vadd.f32 %v718, %v723
    %v725 = vpack.c.bf16 %v724, %v724
    %v726 = vld [vmem:[#allocation16] sm:$0xf]
    %v727 = vld [vmem:[#allocation16 + $0x4] sm:$0xf]
    %v728 = vld [vmem:[#allocation16 + $0x8] sm:$0xf]
    %v729 = vld [vmem:[#allocation16 + $0xc] sm:$0xf]
    %v730 = vpack.c.bf16 %v598, %v598
    %v731 = vld [vmem:[#allocation17] sm:$0xf]
    %v732 = vld [vmem:[#allocation17 + $0x4] sm:$0xf]
    %v733 = vld [vmem:[#allocation17 + $0x8] sm:$0xf]
    %v734 = vld [vmem:[#allocation17 + $0xc] sm:$0xf]
    %v739 = vunpack.c.l.b16 %v731
    %v740 = vunpack.c.l.b16 %v732
    %v741 = vunpack.c.l.b16 %v733
    %v742 = vunpack.c.l.b16 %v734
    %v743 = vpack.c.b16 %v740, %v739
    %v744 = vpack.c.b16 %v742, %v741
    %v748 = vsel %vm219, %v730, 0
    %750 = vmatprep.subr.bf16.mxu0 0
    %751 = vmatpush1.bf16.msra.mxu0 %v743
    %752 = vmatprep.subr.bf16.mxu0 0
    %753 = vmatpush1.bf16.msra.mxu0 %v744
    %754 = vmatprep.subr.bf16.mxu0 0
    %755 = vmatpush1.bf16.msra.mxu0 0
    %756 = vmatprep.subr.bf16.mxu0 0
    %757 = vmatpush1.bf16.msra.mxu0 0
    %758 = vmatprep.subr.bf16.mxu0 0
    %759 = vmatpush1.bf16.msra.mxu0 0
    %760 = vmatprep.subr.bf16.mxu0 0
    %761 = vmatpush1.bf16.msra.mxu0 0
    %762 = vmatprep.subr.bf16.mxu0 0
    %763 = vmatpush1.bf16.msra.mxu0 0
    %764 = vmatprep.subr.bf16.mxu0 0
    %765 = vmatpush1.bf16.msra.mxu0 0
    %766 = vmatprep.subr.bf16.mxu0 0
    %767 = vmatpush1.bf16.msra.mxu0 0
    %768 = vmatprep.subr.bf16.mxu0 0
    %769 = vmatpush1.bf16.msra.mxu0 0
    %770 = vmatprep.subr.bf16.mxu0 0
    %771 = vmatpush1.bf16.msra.mxu0 0
    %772 = vmatprep.subr.bf16.mxu0 0
    %773 = vmatpush1.bf16.msra.mxu0 0
    %774 = vmatprep.subr.bf16.mxu0 0
    %775 = vmatpush1.bf16.msra.mxu0 0
    %776 = vmatprep.subr.bf16.mxu0 0
    %777 = vmatpush1.bf16.msra.mxu0 0
    %778 = vmatprep.subr.bf16.mxu0 0
    %779 = vmatpush1.bf16.msra.mxu0 0
    %780 = vmatprep.subr.bf16.mxu0 0
    %781 = vmatpush1.bf16.msra.mxu0 0
    %782 = vmatprep.mubr.bf16.mxu0 0
    %783 = vmatmul.mubr.bf16.gmra.mrb[0].mxu0 %v748
    %v784 = vpop.f32.mrb[0].mxu0
    %v785 = vadd.f32 0.0, %v784
    %v786 = vpop.f32.mrb[0].mxu0
    %v787 = vpop.f32.mrb[0].mxu0
    %v788 = vpop.f32.mrb[0].mxu0
    %789 = vdwg.mxu0
    %v794 = vunpack.c.l.b16 %v726
    %v795 = vunpack.c.l.b16 %v727
    %v796 = vunpack.c.l.b16 %v728
    %v797 = vunpack.c.l.b16 %v729
    %v798 = vpack.c.b16 %v795, %v794
    %v799 = vpack.c.b16 %v797, %v796
    %v803 = vsel %vm219, %v725, 0
    %805 = vmatprep.subr.bf16.mxu0 0
    %806 = vmatpush1.bf16.msra.mxu0 %v798
    %807 = vmatprep.subr.bf16.mxu0 0
    %808 = vmatpush1.bf16.msra.mxu0 %v799
    %809 = vmatprep.subr.bf16.mxu0 0
    %810 = vmatpush1.bf16.msra.mxu0 0
    %811 = vmatprep.subr.bf16.mxu0 0
    %812 = vmatpush1.bf16.msra.mxu0 0
    %813 = vmatprep.subr.bf16.mxu0 0
    %814 = vmatpush1.bf16.msra.mxu0 0
    %815 = vmatprep.subr.bf16.mxu0 0
    %816 = vmatpush1.bf16.msra.mxu0 0
    %817 = vmatprep.subr.bf16.mxu0 0
    %818 = vmatpush1.bf16.msra.mxu0 0
    %819 = vmatprep.subr.bf16.mxu0 0
    %820 = vmatpush1.bf16.msra.mxu0 0
    %821 = vmatprep.subr.bf16.mxu0 0
    %822 = vmatpush1.bf16.msra.mxu0 0
    %823 = vmatprep.subr.bf16.mxu0 0
    %824 = vmatpush1.bf16.msra.mxu0 0
    %825 = vmatprep.subr.bf16.mxu0 0
    %826 = vmatpush1.bf16.msra.mxu0 0
    %827 = vmatprep.subr.bf16.mxu0 0
    %828 = vmatpush1.bf16.msra.mxu0 0
    %829 = vmatprep.subr.bf16.mxu0 0
    %830 = vmatpush1.bf16.msra.mxu0 0
    %831 = vmatprep.subr.bf16.mxu0 0
    %832 = vmatpush1.bf16.msra.mxu0 0
    %833 = vmatprep.subr.bf16.mxu0 0
    %834 = vmatpush1.bf16.msra.mxu0 0
    %835 = vmatprep.subr.bf16.mxu0 0
    %836 = vmatpush1.bf16.msra.mxu0 0
    %837 = vmatprep.mubr.bf16.mxu0 0
    %838 = vmatmul.mubr.bf16.gmra.mrb[0].mxu0 %v803
    %v839 = vpop.f32.mrb[0].mxu0
    %v840 = vadd.f32 %v785, %v839
    %v841 = vpop.f32.mrb[0].mxu0
    %v842 = vpop.f32.mrb[0].mxu0
    %v843 = vpop.f32.mrb[0].mxu0
    %844 = vdwg.mxu0
    %v845 = vtanh.pop %v840
    %v846 = vpack.c.bf16 %v845, %v845
    %v847 = vld [vmem:[%s14] sm:$0xf]
    %v848 = vld [vmem:[%s14 + $0x4] sm:$0xf]
    %v849 = vld [vmem:[%s14 + $0x8] sm:$0xf]
    %v850 = vld [vmem:[%s14 + $0xc] sm:$0xf]
    %v851 = vld [vmem:[#allocation19] sm:$0x1]
    %v853 = vlaneseq
    %v854 = vshrl.u32 %v853, 7
    %v855 = vsub.s32 0, %v854
    %v856 = vrot.slane %v851, %v855
    %v862 = vunpack.c.l.b16 %v847
    %v863 = vunpack.c.l.b16 %v848
    %v864 = vunpack.c.l.b16 %v849
    %v865 = vunpack.c.l.b16 %v850
    %v866 = vpack.c.b16 %v863, %v862
    %v867 = vpack.c.b16 %v865, %v864
    %v871 = vsel %vm219, %v846, 0
    %873 = vmatprep.subr.bf16.mxu0 0
    %874 = vmatpush1.bf16.msra.mxu0 %v866
    %875 = vmatprep.subr.bf16.mxu0 0
    %876 = vmatpush1.bf16.msra.mxu0 %v867
    %877 = vmatprep.subr.bf16.mxu0 0
    %878 = vmatpush1.bf16.msra.mxu0 0
    %879 = vmatprep.subr.bf16.mxu0 0
    %880 = vmatpush1.bf16.msra.mxu0 0
    %881 = vmatprep.subr.bf16.mxu0 0
    %882 = vmatpush1.bf16.msra.mxu0 0
    %883 = vmatprep.subr.bf16.mxu0 0
    %884 = vmatpush1.bf16.msra.mxu0 0
    %885 = vmatprep.subr.bf16.mxu0 0
    %886 = vmatpush1.bf16.msra.mxu0 0
    %887 = vmatprep.subr.bf16.mxu0 0
    %888 = vmatpush1.bf16.msra.mxu0 0
    %889 = vmatprep.subr.bf16.mxu0 0
    %890 = vmatpush1.bf16.msra.mxu0 0
    %891 = vmatprep.subr.bf16.mxu0 0
    %892 = vmatpush1.bf16.msra.mxu0 0
    %893 = vmatprep.subr.bf16.mxu0 0
    %894 = vmatpush1.bf16.msra.mxu0 0
    %895 = vmatprep.subr.bf16.mxu0 0
    %896 = vmatpush1.bf16.msra.mxu0 0
    %897 = vmatprep.subr.bf16.mxu0 0
    %898 = vmatpush1.bf16.msra.mxu0 0
    %899 = vmatprep.subr.bf16.mxu0 0
    %900 = vmatpush1.bf16.msra.mxu0 0
    %901 = vmatprep.subr.bf16.mxu0 0
    %902 = vmatpush1.bf16.msra.mxu0 0
    %903 = vmatprep.subr.bf16.mxu0 0
    %904 = vmatpush1.bf16.msra.mxu0 0
    %905 = vmatprep.mubr.bf16.mxu0 0
    %906 = vmatmul.mubr.bf16.gmra.mrb[0].mxu0 %v871
    %v907 = vpop.f32.mrb[0].mxu0
    %v908 = vadd.f32 %v856, %v907
    %v909 = vpop.f32.mrb[0].mxu0
    %v910 = vpop.f32.mrb[0].mxu0
    %v911 = vpop.f32.mrb[0].mxu0
    %912 = vdwg.mxu0
    %vm913 = vcmask 125952
    %914 = vst.msk [vmem:[#allocation20] sm:$0xf] %vm913, %v908
    // Predicated region
    $region98: #{decoder_attention_forward.1} parent=1 // pred_check
      _
    $region99: #{decoder_attention_forward.1} parent=1 // pred_check_branch
      %916 = sbr.rel (0) target = $region101
    $region100: #{decoder_attention_forward.1} parent=1 // pred_region
      %s918 = ssub.s32 64, 64
      %919 = vsyncadd [#allocation7], %s918
      %s921 = sshll.u32 [#allocation20], 4
      %s922 = int_to_ptr.vmem [resolvable:$true] %s921
      %924 = dma.vmem_to_hbm [thread:$0]  %s922, 64, %s16, [#allocation7]
    $region101: #{decoder_attention_forward.1} parent=1 // pred_fallthru
      _
    // Predicated region
    $region102: #{decoder_attention_forward.1} parent=1 // pred_check
      _
    $region103: #{decoder_attention_forward.1} parent=1 // pred_check_branch
      %926 = sbr.rel (0) target = $region105
    $region104: #{decoder_attention_forward.1} parent=1 // pred_region
      %s928 = ssub.s32 128, 128
      %929 = vsyncadd [#allocation22], %s928
      %s930 = sshll.u32 [#allocation21], 4
      %s931 = int_to_ptr.vmem [resolvable:$true] %s930
      %936 = dma.vmem_to_hbm [thread:$0]  %s931, 128, %s17, [#allocation22], 64, 64, 4
    $region105: #{decoder_attention_forward.1} parent=1 // pred_fallthru
      _
    // Predicated region
    $region106: #{decoder_attention_forward.1} parent=1 // pred_check
      _
    $region107: #{decoder_attention_forward.1} parent=1 // pred_check_branch
      %938 = sbr.rel (0) target = $region109
    $region108: #{decoder_attention_forward.1} parent=1 // pred_region
      %s940 = ssub.s32 128, 128
      %941 = vsyncadd [#allocation22], %s940
      %s942 = sshll.u32 [#allocation23], 4
      %s943 = int_to_ptr.vmem [resolvable:$true] %s942
      %948 = dma.vmem_to_hbm [thread:$0]  %s943, 128, %s18, [#allocation22], 64, 64, 4
    $region109: #{decoder_attention_forward.1} parent=1 // pred_fallthru
      _
    // Predicated region
    $region110: #{decoder_attention_forward.1} parent=1 // pred_check
      _
    $region111: #{decoder_attention_forward.1} parent=1 // pred_check_branch
      %950 = sbr.rel (0) target = $region113
    $region112: #{decoder_attention_forward.1} parent=1 // pred_region
      %951 = dma.done [#allocation7], 64
    $region113: #{decoder_attention_forward.1} parent=1 // pred_fallthru
      _
    // Predicated region
    $region114: #{decoder_attention_forward.1} parent=1 // pred_check
      _
    $region115: #{decoder_attention_forward.1} parent=1 // pred_check_branch
      %953 = sbr.rel (0) target = $region117
    $region116: #{decoder_attention_forward.1} parent=1 // pred_region
      %954 = dma.done [#allocation22], 128
    $region117: #{decoder_attention_forward.1} parent=1 // pred_fallthru
      _
    // Predicated region
    $region118: #{decoder_attention_forward.1} parent=1 // pred_check
      _
    $region119: #{decoder_attention_forward.1} parent=1 // pred_check_branch
      %956 = sbr.rel (0) target = $region121
    $region120: #{decoder_attention_forward.1} parent=1 // pred_region
      %957 = dma.done [#allocation22], 128
    $region121: #{decoder_attention_forward.1} parent=1 // pred_fallthru
      _
    %958 = vsyncpa [#allocation6], 1
    %959 = vsyncpa [#allocation9], 1
    %960 = vsyncpa [#allocation12], 1
    %961 = vsyncpa [#allocation15], 1
    %962 = vsyncpa [#allocation18], 1
    %963 = vsyncpa [#allocation7], 1
    %964 = vsyncpa [#allocation22], 1

</llo_original>
